<compile_context>
chip_gen: v6e
topology: v6e:2x2x1
jax: 0.10.0
libtpu: 0.0.40
codegen_flags: <defaults>
</compile_context>

<pallas_src>
import jax
import jax.numpy as jnp
from jax.experimental import pallas as pl
from jax.experimental.pallas import tpu as pltpu


# ----------------------------- Pallas kernel --------------------------------

def _make_up_kernel(c1, c2, h, w, cfg):
    """Fused upsample + concat + [conv3x3 -> BN -> ReLU]*len(cfg) kernel."""
    h2, w2 = 2 * h, 2 * w
    p = h2 * w2                                   # flattened spatial (lane axis)
    halo = w2 + 1                                 # max |flat 3x3 tap offset|
    offs = [(dy - 1) * w2 + (dx - 1) for dy in range(3) for dx in range(3)]
    n_layers = len(cfg)

    def kernel(*refs):
        x1_ref, x2_ref, kup_ref, mask_ref = refs[:4]
        layer_refs = refs[4:4 + 3 * n_layers]
        o_ref = refs[4 + 3 * n_layers]
        pad_ref, col_ref = refs[4 + 3 * n_layers + 1:]

        # Zero the halo-padded activation buffer (borders stay zero; the
        # interior is overwritten below).
        pad_ref[...] = jnp.zeros(pad_ref.shape, pad_ref.dtype)

        # ---- fused prologue: concat([x2, bilinear_up(x1)]) written straight
        #      into the flat, halo-padded, channel-major activation buffer.
        pad_ref[0:c2, halo:halo + p] = x2_ref[0].astype(pad_ref.dtype)
        x1u = jnp.dot(x1_ref[0], kup_ref[...],
                      preferred_element_type=jnp.float32)        # (c1, p) f32
        pad_ref[c2:c2 + c1, halo:halo + p] = x1u.astype(pad_ref.dtype)

        # ---- conv3x3 + BN + ReLU chain; activations never leave VMEM ----
        cin = c1 + c2
        for li, cout in enumerate(cfg):
            w_ref, scale_ref, shift_ref = layer_refs[3 * li:3 * li + 3]

            # im2col: 9 shifted + edge-masked copies -> one (9*cin, p) slab.
            # Shifts are plain static-offset lane slices of the padded buffer;
            # the mask zeroes row-wrap / out-of-image taps ('same' padding).
            for k, o in enumerate(offs):
                col_ref[k * cin:(k + 1) * cin, :] = (
                    pad_ref[0:cin, halo + o:halo + o + p]
                    * mask_ref[k:k + 1, :])

            # One fat MXU matmul per layer, bf16 inputs, f32 accumulation.
            # (cout, p) accumulator / store is lane-dense.
            acc = jnp.dot(w_ref[...], col_ref[0:9 * cin, :],
                          preferred_element_type=jnp.float32)     # (cout, p)
            y = jnp.maximum(acc * scale_ref[...] + shift_ref[...], 0.0)

            if li + 1 < n_layers:
                pad_ref[0:cout, halo:halo + p] = y.astype(pad_ref.dtype)
            else:
                o_ref[0] = y.astype(o_ref.dtype)
            cin = cout

    return kernel


# ------------------------------ host-side helpers ----------------------------

def _upsample_matrix(n_in, n_out, dtype=jnp.float32):
    """Interpolation matrix M (n_out, n_in): bilinear, align_corners=True."""
    if n_in == 1:
        return jnp.ones((n_out, 1), dtype)
    src = jnp.arange(n_out, dtype=jnp.float32) * (n_in - 1) / (n_out - 1)
    lo = jnp.clip(jnp.floor(src).astype(jnp.int32), 0, n_in - 2)
    frac = src - lo.astype(jnp.float32)
    rows = jnp.arange(n_out)
    m = jnp.zeros((n_out, n_in), jnp.float32)
    m = m.at[rows, lo].set(1.0 - frac)
    m = m.at[rows, lo + 1].add(frac)
    return m.astype(dtype)


def _conv_edge_masks(h2, w2, dtype=jnp.bfloat16):
    """(9, h2*w2) {0,1} masks: tap k=dy*3+dx valid iff its source pixel of the
    'same'-padded 3x3 conv lies inside the image (kills row-wrap artifacts of
    the flattened-spatial shift)."""
    pidx = jnp.arange(h2 * w2, dtype=jnp.int32)
    y = pidx // w2
    x = pidx % w2
    rows = []
    for dy in range(3):
        for dx in range(3):
            ky, kx = dy - 1, dx - 1
            ok = ((y + ky >= 0) & (y + ky < h2) & (x + kx >= 0) & (x + kx < w2))
            rows.append(ok)
    return jnp.stack(rows, axis=0).astype(dtype)


def init_up_params(key, in_channels, cfg, eps=1e-5):
    """Matches the PyTorch module right after _initialize_weights (eval-mode BN)."""
    params = []
    c = in_channels
    for v in cfg:
        key, k1 = jax.random.split(key)
        fan_out = v * 3 * 3                       # kaiming_normal_, fan_out, relu
        std = (2.0 / fan_out) ** 0.5
        wt = jax.random.normal(k1, (3, 3, c, v), jnp.float32) * std   # HWIO
        conv_bias = jnp.zeros((v,), jnp.float32)
        gamma = jnp.ones((v,), jnp.float32)       # BN weight
        beta = jnp.zeros((v,), jnp.float32)       # BN bias
        mean = jnp.zeros((v,), jnp.float32)       # running_mean
        var = jnp.ones((v,), jnp.float32)         # running_var
        scale = gamma / jnp.sqrt(var + eps)
        shift = (conv_bias - mean) * scale + beta
        params.append((wt, scale, shift))
        c = v
    return params


@jax.jit
def up_forward(x1_nchw, x2_nchw, params):
    """Equivalent of Up.forward(x1, x2); NCHW in / NCHW out like PyTorch."""
    n, c1, h, w = x1_nchw.shape
    n2, c2, h2, w2 = x2_nchw.shape
    assert n2 == n and h2 == 2 * h and w2 == 2 * w
    p = h2 * w2
    cfg = tuple(int(wt.shape[-1]) for (wt, _, _) in params)
    cin0 = c1 + c2
    max_cin = max((cin0,) + cfg[:-1])

    # Bilinear (align_corners=True) upsample as one flat matmul:
    #   x1u_flat = x1_flat @ kron(My, Mx)^T        (c1, h*w) @ (h*w, p)
    # TODO(synk): for large H, W use a separable upsample + spatial row tiling
    # (with a 1-row halo) and a second parallel grid axis — the Kronecker
    # matrix and whole-image VMEM blocks only scale to small decoder tiles
    # (v7x has 64 MiB VMEM, 2 TensorCores/chip).
    my = _upsample_matrix(h, h2)
    mx = _upsample_matrix(w, w2)
    kup = jnp.kron(my, mx).T.astype(jnp.float32)           # (h*w, p)
    masks = _conv_edge_masks(h2, w2, jnp.bfloat16)         # (9, p)

    args = [x1_nchw.reshape(n, c1, h * w),
            x2_nchw.reshape(n, c2, p),
            kup, masks]
    in_specs = [
        pl.BlockSpec((1, c1, h * w), lambda i: (i, 0, 0)),
        pl.BlockSpec((1, c2, p), lambda i: (i, 0, 0)),
        pl.BlockSpec((h * w, p), lambda i: (0, 0)),
        pl.BlockSpec((9, p), lambda i: (0, 0)),
    ]
    cin = cin0
    for (wt, scale, shift) in params:
        cout = int(wt.shape[-1])
        # (3,3,cin,cout) -> single (cout, 9*cin) bf16 slab, row order (dy,dx,ci).
        wmat = wt.reshape(9 * cin, cout).T.astype(jnp.bfloat16)
        args += [wmat,
                 scale.reshape(cout, 1).astype(jnp.float32),
                 shift.reshape(cout, 1).astype(jnp.float32)]
        in_specs += [
            pl.BlockSpec((cout, 9 * cin), lambda i: (0, 0)),
            pl.BlockSpec((cout, 1), lambda i: (0, 0)),
            pl.BlockSpec((cout, 1), lambda i: (0, 0)),
        ]
        cin = cout

    cout_last = cfg[-1]
    out_flat = pl.pallas_call(
        _make_up_kernel(c1, c2, h, w, cfg),
        out_shape=jax.ShapeDtypeStruct((n, cout_last, p), x1_nchw.dtype),
        grid_spec=pltpu.PrefetchScalarGridSpec(
            num_scalar_prefetch=0,
            grid=(n,),                              # one parallel step / sample
            in_specs=in_specs,
            out_specs=pl.BlockSpec((1, cout_last, p), lambda i: (i, 0, 0)),
            scratch_shapes=[
                pltpu.VMEM((max_cin, p + 2 * (w2 + 1)), jnp.bfloat16),  # halo act
                pltpu.VMEM((9 * max_cin, p), jnp.bfloat16),             # im2col
            ],
        ),
        compiler_params=pltpu.CompilerParams(
            dimension_semantics=("parallel",)),
    )(*args)
    return out_flat.reshape(n, cout_last, h2, w2)


# ------------------------------ f32 reference --------------------------------

def up_forward_reference(x1, x2, params):
    """Pure-JAX reference (bilinear up + concat + conv/BN/ReLU chain)."""
    _, _, h, w = x1.shape
    my = _upsample_matrix(h, 2 * h)
    mx = _upsample_matrix(w, 2 * w)
    x1u = jnp.einsum('oh,nchw->ncow', my, x1)
    x1u = jnp.einsum('pw,ncow->ncop', mx, x1u)
    x = jnp.concatenate([x2, x1u], axis=1)
    for (wt, scale, shift) in params:
        x = jax.lax.conv_general_dilated(
            x, wt, window_strides=(1, 1), padding='SAME',
            dimension_numbers=('NCHW', 'HWIO', 'NCHW'))
        x = x * scale[None, :, None, None] + shift[None, :, None, None]
        x = jnp.maximum(x, 0.0)
    return x


# --------------------------------- main ---------------------------------------

if __name__ == "__main__":
    key = jax.random.PRNGKey(0)
    k1, k2, kp = jax.random.split(key, 3)

    N, C1, H, W = 2, 4, 8, 8            # x1: low-res feature map (NCHW)
    C2 = 4                              # x2: skip connection at 2x resolution
    x1 = jax.random.normal(k1, (N, C1, H, W), jnp.float32)
    x2 = jax.random.normal(k2, (N, C2, 2 * H, 2 * W), jnp.float32)

    cfg = [8, 8]                        # two conv-bn-relu blocks
    params = init_up_params(kp, C1 + C2, cfg)

    out = jax.block_until_ready(up_forward(x1, x2, params))
    assert out.shape == (N, cfg[-1], 2 * H, 2 * W), out.shape

    # Sanity check vs. pure-JAX reference (kernel uses bf16 matmul inputs with
    # f32 accumulation, hence the loose tolerance).
    ref = jax.block_until_ready(up_forward_reference(x1, x2, params))
    max_err = float(jnp.max(jnp.abs(out - ref)))
    assert max_err < 0.2, max_err

    print("KERNEL_OK")
</pallas_src>

<mosaic_0001>
module attributes {stable_mosaic.version = 11 : i64} {
  func.func private @main(%arg0: i32) attributes {dimension_semantics = [#tpu.dimension_semantics<core_parallel>], iteration_bounds = array<i64: 2>, tpu.core_type = #tpu.core_type<sc_scalar_subcore>, window_params = []} {
    return
  }
}

module attributes {stable_mosaic.version = 11 : i64} {
  func.func private @main(%arg0: i32) attributes {dimension_semantics = [#tpu.dimension_semantics<core_parallel>], iteration_bounds = array<i64: 2>, tpu.core_type = #tpu.core_type<sc_scalar_subcore>, window_params = []} {
    return
  }
}

module attributes {stable_mosaic.version = 11 : i64} {
  func.func @kernel(%arg0: i32, %arg1: memref<1x4x64xf32, #tpu.memory_space<vmem>>, %arg2: memref<1x4x256xf32, #tpu.memory_space<vmem>>, %arg3: memref<64x256xf32, #tpu.memory_space<vmem>>, %arg4: memref<9x256xbf16, #tpu.memory_space<vmem>>, %arg5: memref<8x72xbf16, #tpu.memory_space<vmem>>, %arg6: memref<8x1xf32, #tpu.memory_space<vmem>>, %arg7: memref<8x1xf32, #tpu.memory_space<vmem>>, %arg8: memref<8x72xbf16, #tpu.memory_space<vmem>>, %arg9: memref<8x1xf32, #tpu.memory_space<vmem>>, %arg10: memref<8x1xf32, #tpu.memory_space<vmem>>, %arg11: memref<1x8x256xf32, #tpu.memory_space<vmem>>, %arg12: memref<8x290xbf16, #tpu.memory_space<vmem>>, %arg13: memref<72x256xbf16, #tpu.memory_space<vmem>>) attributes {dimension_semantics = [#tpu.dimension_semantics<parallel>], iteration_bounds = array<i64: 2>, scalar_prefetch = 0 : i64, scratch_operands = 2 : i64, tpu.core_type = #tpu.core_type<tc>, window_params = [{transform_indices = @transform_0, window_bounds = array<i64: 1, 4, 64>}, {transform_indices = @transform_1, window_bounds = array<i64: 1, 4, 256>}, {pipeline_mode = #tpu.pipeline_mode<synchronous>, transform_indices = @transform_2, window_bounds = array<i64: 64, 256>}, {pipeline_mode = #tpu.pipeline_mode<synchronous>, transform_indices = @transform_3, window_bounds = array<i64: 9, 256>}, {pipeline_mode = #tpu.pipeline_mode<synchronous>, transform_indices = @transform_4, window_bounds = array<i64: 8, 72>}, {pipeline_mode = #tpu.pipeline_mode<synchronous>, transform_indices = @transform_5, window_bounds = array<i64: 8, 1>}, {pipeline_mode = #tpu.pipeline_mode<synchronous>, transform_indices = @transform_6, window_bounds = array<i64: 8, 1>}, {pipeline_mode = #tpu.pipeline_mode<synchronous>, transform_indices = @transform_7, window_bounds = array<i64: 8, 72>}, {pipeline_mode = #tpu.pipeline_mode<synchronous>, transform_indices = @transform_8, window_bounds = array<i64: 8, 1>}, {pipeline_mode = #tpu.pipeline_mode<synchronous>, transform_indices = @transform_9, window_bounds = array<i64: 8, 1>}, {transform_indices = @transform_10, window_bounds = array<i64: 1, 8, 256>}]} {
    %cst = arith.constant 0.000000e+00 : bf16
    %0 = vector.broadcast %cst : bf16 to vector<8x290xbf16>
    %c0 = arith.constant 0 : index
    %c0_0 = arith.constant 0 : index
    %1 = vector.load %arg12[%c0, %c0_0] : memref<8x290xbf16, #tpu.memory_space<vmem>>, vector<8x290xbf16>
    tpu.vector_store %arg12[%c0, %c0_0], %0 {strides = array<i32>} : memref<8x290xbf16, #tpu.memory_space<vmem>>, vector<8x290xbf16>,
    %c0_1 = arith.constant 0 : index
    %c0_2 = arith.constant 0 : index
    %c0_3 = arith.constant 0 : index
    %2 = vector.load %arg2[%c0_1, %c0_2, %c0_3] : memref<1x4x256xf32, #tpu.memory_space<vmem>>, vector<1x4x256xf32>
    %3 = vector.shape_cast %2 : vector<1x4x256xf32> to vector<4x256xf32>
    %4 = arith.truncf %3 : vector<4x256xf32> to vector<4x256xbf16>
    %c0_4 = arith.constant 0 : index
    %c17 = arith.constant 17 : index
    %5 = vector.load %arg12[%c0_4, %c17] : memref<8x290xbf16, #tpu.memory_space<vmem>>, vector<4x256xbf16>
    tpu.vector_store %arg12[%c0_4, %c17], %4 {strides = array<i32>} : memref<8x290xbf16, #tpu.memory_space<vmem>>, vector<4x256xbf16>,
    %c0_5 = arith.constant 0 : index
    %c0_6 = arith.constant 0 : index
    %c0_7 = arith.constant 0 : index
    %6 = vector.load %arg1[%c0_5, %c0_6, %c0_7] : memref<1x4x64xf32, #tpu.memory_space<vmem>>, vector<1x4x64xf32>
    %7 = vector.shape_cast %6 : vector<1x4x64xf32> to vector<4x64xf32>
    %c0_8 = arith.constant 0 : index
    %c0_9 = arith.constant 0 : index
    %8 = vector.load %arg3[%c0_8, %c0_9] : memref<64x256xf32, #tpu.memory_space<vmem>>, vector<64x256xf32>
    %cst_10 = arith.constant dense<0.000000e+00> : vector<4x256xf32>
    %9 = tpu.matmul %7, %8, %cst_10 {dimension_numbers = #tpu.dot_dimension_numbers<[1], [0], [0], [1], [0, 0, 1, 1], [], []>} : vector<4x64xf32>, vector<64x256xf32>, vector<4x256xf32> -> vector<4x256xf32>
    %10 = arith.truncf %9 : vector<4x256xf32> to vector<4x256xbf16>
    %c4 = arith.constant 4 : index
    %c17_11 = arith.constant 17 : index
    %11 = vector.load %arg12[%c4, %c17_11] : memref<8x290xbf16, #tpu.memory_space<vmem>>, vector<4x256xbf16>
    tpu.vector_store %arg12[%c4, %c17_11], %10 {strides = array<i32>} : memref<8x290xbf16, #tpu.memory_space<vmem>>, vector<4x256xbf16>,
    %c0_12 = arith.constant 0 : index
    %c0_13 = arith.constant 0 : index
    %12 = vector.load %arg12[%c0_12, %c0_13] : memref<8x290xbf16, #tpu.memory_space<vmem>>, vector<8x256xbf16>
    %c0_14 = arith.constant 0 : index
    %c0_15 = arith.constant 0 : index
    %13 = vector.load %arg4[%c0_14, %c0_15] : memref<9x256xbf16, #tpu.memory_space<vmem>>, vector<1x256xbf16>
    %14 = vector.broadcast %13 : vector<1x256xbf16> to vector<8x256xbf16>
    %15 = arith.mulf %12, %14 : vector<8x256xbf16>
    %c0_16 = arith.constant 0 : index
    %c0_17 = arith.constant 0 : index
    %16 = vector.load %arg13[%c0_16, %c0_17] : memref<72x256xbf16, #tpu.memory_space<vmem>>, vector<8x256xbf16>
    tpu.vector_store %arg13[%c0_16, %c0_17], %15 {strides = array<i32>} : memref<72x256xbf16, #tpu.memory_space<vmem>>, vector<8x256xbf16>,
    %c0_18 = arith.constant 0 : index
    %c1 = arith.constant 1 : index
    %17 = vector.load %arg12[%c0_18, %c1] : memref<8x290xbf16, #tpu.memory_space<vmem>>, vector<8x256xbf16>
    %c1_19 = arith.constant 1 : index
    %c0_20 = arith.constant 0 : index
    %18 = vector.load %arg4[%c1_19, %c0_20] : memref<9x256xbf16, #tpu.memory_space<vmem>>, vector<1x256xbf16>
    %19 = vector.broadcast %18 : vector<1x256xbf16> to vector<8x256xbf16>
    %20 = arith.mulf %17, %19 : vector<8x256xbf16>
    %c8 = arith.constant 8 : index
    %c0_21 = arith.constant 0 : index
    %21 = vector.load %arg13[%c8, %c0_21] : memref<72x256xbf16, #tpu.memory_space<vmem>>, vector<8x256xbf16>
    tpu.vector_store %arg13[%c8, %c0_21], %20 {strides = array<i32>} : memref<72x256xbf16, #tpu.memory_space<vmem>>, vector<8x256xbf16>,
    %c0_22 = arith.constant 0 : index
    %c2 = arith.constant 2 : index
    %22 = vector.load %arg12[%c0_22, %c2] : memref<8x290xbf16, #tpu.memory_space<vmem>>, vector<8x256xbf16>
    %c2_23 = arith.constant 2 : index
    %c0_24 = arith.constant 0 : index
    %23 = vector.load %arg4[%c2_23, %c0_24] : memref<9x256xbf16, #tpu.memory_space<vmem>>, vector<1x256xbf16>
    %24 = vector.broadcast %23 : vector<1x256xbf16> to vector<8x256xbf16>
    %25 = arith.mulf %22, %24 : vector<8x256xbf16>
    %c16 = arith.constant 16 : index
    %c0_25 = arith.constant 0 : index
    %26 = vector.load %arg13[%c16, %c0_25] : memref<72x256xbf16, #tpu.memory_space<vmem>>, vector<8x256xbf16>
    tpu.vector_store %arg13[%c16, %c0_25], %25 {strides = array<i32>} : memref<72x256xbf16, #tpu.memory_space<vmem>>, vector<8x256xbf16>,
    %c0_26 = arith.constant 0 : index
    %c16_27 = arith.constant 16 : index
    %27 = vector.load %arg12[%c0_26, %c16_27] : memref<8x290xbf16, #tpu.memory_space<vmem>>, vector<8x256xbf16>
    %c3 = arith.constant 3 : index
    %c0_28 = arith.constant 0 : index
    %28 = vector.load %arg4[%c3, %c0_28] : memref<9x256xbf16, #tpu.memory_space<vmem>>, vector<1x256xbf16>
    %29 = vector.broadcast %28 : vector<1x256xbf16> to vector<8x256xbf16>
    %30 = arith.mulf %27, %29 : vector<8x256xbf16>
    %c24 = arith.constant 24 : index
    %c0_29 = arith.constant 0 : index
    %31 = vector.load %arg13[%c24, %c0_29] : memref<72x256xbf16, #tpu.memory_space<vmem>>, vector<8x256xbf16>
    tpu.vector_store %arg13[%c24, %c0_29], %30 {strides = array<i32>} : memref<72x256xbf16, #tpu.memory_space<vmem>>, vector<8x256xbf16>,
    %c0_30 = arith.constant 0 : index
    %c17_31 = arith.constant 17 : index
    %32 = vector.load %arg12[%c0_30, %c17_31] : memref<8x290xbf16, #tpu.memory_space<vmem>>, vector<8x256xbf16>
    %c4_32 = arith.constant 4 : index
    %c0_33 = arith.constant 0 : index
    %33 = vector.load %arg4[%c4_32, %c0_33] : memref<9x256xbf16, #tpu.memory_space<vmem>>, vector<1x256xbf16>
    %34 = vector.broadcast %33 : vector<1x256xbf16> to vector<8x256xbf16>
    %35 = arith.mulf %32, %34 : vector<8x256xbf16>
    %c32 = arith.constant 32 : index
    %c0_34 = arith.constant 0 : index
    %36 = vector.load %arg13[%c32, %c0_34] : memref<72x256xbf16, #tpu.memory_space<vmem>>, vector<8x256xbf16>
    tpu.vector_store %arg13[%c32, %c0_34], %35 {strides = array<i32>} : memref<72x256xbf16, #tpu.memory_space<vmem>>, vector<8x256xbf16>,
    %c0_35 = arith.constant 0 : index
    %c18 = arith.constant 18 : index
    %37 = vector.load %arg12[%c0_35, %c18] : memref<8x290xbf16, #tpu.memory_space<vmem>>, vector<8x256xbf16>
    %c5 = arith.constant 5 : index
    %c0_36 = arith.constant 0 : index
    %38 = vector.load %arg4[%c5, %c0_36] : memref<9x256xbf16, #tpu.memory_space<vmem>>, vector<1x256xbf16>
    %39 = vector.broadcast %38 : vector<1x256xbf16> to vector<8x256xbf16>
    %40 = arith.mulf %37, %39 : vector<8x256xbf16>
    %c40 = arith.constant 40 : index
    %c0_37 = arith.constant 0 : index
    %41 = vector.load %arg13[%c40, %c0_37] : memref<72x256xbf16, #tpu.memory_space<vmem>>, vector<8x256xbf16>
    tpu.vector_store %arg13[%c40, %c0_37], %40 {strides = array<i32>} : memref<72x256xbf16, #tpu.memory_space<vmem>>, vector<8x256xbf16>,
    %c0_38 = arith.constant 0 : index
    %c32_39 = arith.constant 32 : index
    %42 = vector.load %arg12[%c0_38, %c32_39] : memref<8x290xbf16, #tpu.memory_space<vmem>>, vector<8x256xbf16>
    %c6 = arith.constant 6 : index
    %c0_40 = arith.constant 0 : index
    %43 = vector.load %arg4[%c6, %c0_40] : memref<9x256xbf16, #tpu.memory_space<vmem>>, vector<1x256xbf16>
    %44 = vector.broadcast %43 : vector<1x256xbf16> to vector<8x256xbf16>
    %45 = arith.mulf %42, %44 : vector<8x256xbf16>
    %c48 = arith.constant 48 : index
    %c0_41 = arith.constant 0 : index
    %46 = vector.load %arg13[%c48, %c0_41] : memref<72x256xbf16, #tpu.memory_space<vmem>>, vector<8x256xbf16>
    tpu.vector_store %arg13[%c48, %c0_41], %45 {strides = array<i32>} : memref<72x256xbf16, #tpu.memory_space<vmem>>, vector<8x256xbf16>,
    %c0_42 = arith.constant 0 : index
    %c33 = arith.constant 33 : index
    %47 = vector.load %arg12[%c0_42, %c33] : memref<8x290xbf16, #tpu.memory_space<vmem>>, vector<8x256xbf16>
    %c7 = arith.constant 7 : index
    %c0_43 = arith.constant 0 : index
    %48 = vector.load %arg4[%c7, %c0_43] : memref<9x256xbf16, #tpu.memory_space<vmem>>, vector<1x256xbf16>
    %49 = vector.broadcast %48 : vector<1x256xbf16> to vector<8x256xbf16>
    %50 = arith.mulf %47, %49 : vector<8x256xbf16>
    %c56 = arith.constant 56 : index
    %c0_44 = arith.constant 0 : index
    %51 = vector.load %arg13[%c56, %c0_44] : memref<72x256xbf16, #tpu.memory_space<vmem>>, vector<8x256xbf16>
    tpu.vector_store %arg13[%c56, %c0_44], %50 {strides = array<i32>} : memref<72x256xbf16, #tpu.memory_space<vmem>>, vector<8x256xbf16>,
    %c0_45 = arith.constant 0 : index
    %c34 = arith.constant 34 : index
    %52 = vector.load %arg12[%c0_45, %c34] : memref<8x290xbf16, #tpu.memory_space<vmem>>, vector<8x256xbf16>
    %c8_46 = arith.constant 8 : index
    %c0_47 = arith.constant 0 : index
    %53 = vector.load %arg4[%c8_46, %c0_47] : memref<9x256xbf16, #tpu.memory_space<vmem>>, vector<1x256xbf16>
    %54 = vector.broadcast %53 : vector<1x256xbf16> to vector<8x256xbf16>
    %55 = arith.mulf %52, %54 : vector<8x256xbf16>
    %c64 = arith.constant 64 : index
    %c0_48 = arith.constant 0 : index
    %56 = vector.load %arg13[%c64, %c0_48] : memref<72x256xbf16, #tpu.memory_space<vmem>>, vector<8x256xbf16>
    tpu.vector_store %arg13[%c64, %c0_48], %55 {strides = array<i32>} : memref<72x256xbf16, #tpu.memory_space<vmem>>, vector<8x256xbf16>,
    %c0_49 = arith.constant 0 : index
    %c0_50 = arith.constant 0 : index
    %57 = vector.load %arg5[%c0_49, %c0_50] : memref<8x72xbf16, #tpu.memory_space<vmem>>, vector<8x72xbf16>
    %c0_51 = arith.constant 0 : index
    %c0_52 = arith.constant 0 : index
    %58 = vector.load %arg13[%c0_51, %c0_52] : memref<72x256xbf16, #tpu.memory_space<vmem>>, vector<72x256xbf16>
    %cst_53 = arith.constant dense<0.000000e+00> : vector<8x256xf32>
    %59 = tpu.matmul %57, %58, %cst_53 {dimension_numbers = #tpu.dot_dimension_numbers<[1], [0], [0], [1], [0, 0, 1, 1], [], []>} : vector<8x72xbf16>, vector<72x256xbf16>, vector<8x256xf32> -> vector<8x256xf32>
    %c0_54 = arith.constant 0 : index
    %c0_55 = arith.constant 0 : index
    %60 = vector.load %arg6[%c0_54, %c0_55] : memref<8x1xf32, #tpu.memory_space<vmem>>, vector<8x1xf32>
    %61 = vector.broadcast %60 : vector<8x1xf32> to vector<8x256xf32>
    %62 = arith.mulf %59, %61 : vector<8x256xf32>
    %c0_56 = arith.constant 0 : index
    %c0_57 = arith.constant 0 : index
    %63 = vector.load %arg7[%c0_56, %c0_57] : memref<8x1xf32, #tpu.memory_space<vmem>>, vector<8x1xf32>
    %64 = vector.broadcast %63 : vector<8x1xf32> to vector<8x256xf32>
    %65 = arith.addf %62, %64 : vector<8x256xf32>
    %cst_58 = arith.constant 0.000000e+00 : f32
    %66 = vector.broadcast %cst_58 : f32 to vector<8x256xf32>
    %67 = arith.maximumf %65, %66 : vector<8x256xf32>
    %68 = arith.truncf %67 : vector<8x256xf32> to vector<8x256xbf16>
    %c0_59 = arith.constant 0 : index
    %c17_60 = arith.constant 17 : index
    %69 = vector.load %arg12[%c0_59, %c17_60] : memref<8x290xbf16, #tpu.memory_space<vmem>>, vector<8x256xbf16>
    tpu.vector_store %arg12[%c0_59, %c17_60], %68 {strides = array<i32>} : memref<8x290xbf16, #tpu.memory_space<vmem>>, vector<8x256xbf16>,
    %c0_61 = arith.constant 0 : index
    %c0_62 = arith.constant 0 : index
    %70 = vector.load %arg12[%c0_61, %c0_62] : memref<8x290xbf16, #tpu.memory_space<vmem>>, vector<8x256xbf16>
    %c0_63 = arith.constant 0 : index
    %c0_64 = arith.constant 0 : index
    %71 = vector.load %arg4[%c0_63, %c0_64] : memref<9x256xbf16, #tpu.memory_space<vmem>>, vector<1x256xbf16>
    %72 = vector.broadcast %71 : vector<1x256xbf16> to vector<8x256xbf16>
    %73 = arith.mulf %70, %72 : vector<8x256xbf16>
    %c0_65 = arith.constant 0 : index
    %c0_66 = arith.constant 0 : index
    %74 = vector.load %arg13[%c0_65, %c0_66] : memref<72x256xbf16, #tpu.memory_space<vmem>>, vector<8x256xbf16>
    tpu.vector_store %arg13[%c0_65, %c0_66], %73 {strides = array<i32>} : memref<72x256xbf16, #tpu.memory_space<vmem>>, vector<8x256xbf16>,
    %c0_67 = arith.constant 0 : index
    %c1_68 = arith.constant 1 : index
    %75 = vector.load %arg12[%c0_67, %c1_68] : memref<8x290xbf16, #tpu.memory_space<vmem>>, vector<8x256xbf16>
    %c1_69 = arith.constant 1 : index
    %c0_70 = arith.constant 0 : index
    %76 = vector.load %arg4[%c1_69, %c0_70] : memref<9x256xbf16, #tpu.memory_space<vmem>>, vector<1x256xbf16>
    %77 = vector.broadcast %76 : vector<1x256xbf16> to vector<8x256xbf16>
    %78 = arith.mulf %75, %77 : vector<8x256xbf16>
    %c8_71 = arith.constant 8 : index
    %c0_72 = arith.constant 0 : index
    %79 = vector.load %arg13[%c8_71, %c0_72] : memref<72x256xbf16, #tpu.memory_space<vmem>>, vector<8x256xbf16>
    tpu.vector_store %arg13[%c8_71, %c0_72], %78 {strides = array<i32>} : memref<72x256xbf16, #tpu.memory_space<vmem>>, vector<8x256xbf16>,
    %c0_73 = arith.constant 0 : index
    %c2_74 = arith.constant 2 : index
    %80 = vector.load %arg12[%c0_73, %c2_74] : memref<8x290xbf16, #tpu.memory_space<vmem>>, vector<8x256xbf16>
    %c2_75 = arith.constant 2 : index
    %c0_76 = arith.constant 0 : index
    %81 = vector.load %arg4[%c2_75, %c0_76] : memref<9x256xbf16, #tpu.memory_space<vmem>>, vector<1x256xbf16>
    %82 = vector.broadcast %81 : vector<1x256xbf16> to vector<8x256xbf16>
    %83 = arith.mulf %80, %82 : vector<8x256xbf16>
    %c16_77 = arith.constant 16 : index
    %c0_78 = arith.constant 0 : index
    %84 = vector.load %arg13[%c16_77, %c0_78] : memref<72x256xbf16, #tpu.memory_space<vmem>>, vector<8x256xbf16>
    tpu.vector_store %arg13[%c16_77, %c0_78], %83 {strides = array<i32>} : memref<72x256xbf16, #tpu.memory_space<vmem>>, vector<8x256xbf16>,
    %c0_79 = arith.constant 0 : index
    %c16_80 = arith.constant 16 : index
    %85 = vector.load %arg12[%c0_79, %c16_80] : memref<8x290xbf16, #tpu.memory_space<vmem>>, vector<8x256xbf16>
    %c3_81 = arith.constant 3 : index
    %c0_82 = arith.constant 0 : index
    %86 = vector.load %arg4[%c3_81, %c0_82] : memref<9x256xbf16, #tpu.memory_space<vmem>>, vector<1x256xbf16>
    %87 = vector.broadcast %86 : vector<1x256xbf16> to vector<8x256xbf16>
    %88 = arith.mulf %85, %87 : vector<8x256xbf16>
    %c24_83 = arith.constant 24 : index
    %c0_84 = arith.constant 0 : index
    %89 = vector.load %arg13[%c24_83, %c0_84] : memref<72x256xbf16, #tpu.memory_space<vmem>>, vector<8x256xbf16>
    tpu.vector_store %arg13[%c24_83, %c0_84], %88 {strides = array<i32>} : memref<72x256xbf16, #tpu.memory_space<vmem>>, vector<8x256xbf16>,
    %c0_85 = arith.constant 0 : index
    %c17_86 = arith.constant 17 : index
    %90 = vector.load %arg12[%c0_85, %c17_86] : memref<8x290xbf16, #tpu.memory_space<vmem>>, vector<8x256xbf16>
    %c4_87 = arith.constant 4 : index
    %c0_88 = arith.constant 0 : index
    %91 = vector.load %arg4[%c4_87, %c0_88] : memref<9x256xbf16, #tpu.memory_space<vmem>>, vector<1x256xbf16>
    %92 = vector.broadcast %91 : vector<1x256xbf16> to vector<8x256xbf16>
    %93 = arith.mulf %90, %92 : vector<8x256xbf16>
    %c32_89 = arith.constant 32 : index
    %c0_90 = arith.constant 0 : index
    %94 = vector.load %arg13[%c32_89, %c0_90] : memref<72x256xbf16, #tpu.memory_space<vmem>>, vector<8x256xbf16>
    tpu.vector_store %arg13[%c32_89, %c0_90], %93 {strides = array<i32>} : memref<72x256xbf16, #tpu.memory_space<vmem>>, vector<8x256xbf16>,
    %c0_91 = arith.constant 0 : index
    %c18_92 = arith.constant 18 : index
    %95 = vector.load %arg12[%c0_91, %c18_92] : memref<8x290xbf16, #tpu.memory_space<vmem>>, vector<8x256xbf16>
    %c5_93 = arith.constant 5 : index
    %c0_94 = arith.constant 0 : index
    %96 = vector.load %arg4[%c5_93, %c0_94] : memref<9x256xbf16, #tpu.memory_space<vmem>>, vector<1x256xbf16>
    %97 = vector.broadcast %96 : vector<1x256xbf16> to vector<8x256xbf16>
    %98 = arith.mulf %95, %97 : vector<8x256xbf16>
    %c40_95 = arith.constant 40 : index
    %c0_96 = arith.constant 0 : index
    %99 = vector.load %arg13[%c40_95, %c0_96] : memref<72x256xbf16, #tpu.memory_space<vmem>>, vector<8x256xbf16>
    tpu.vector_store %arg13[%c40_95, %c0_96], %98 {strides = array<i32>} : memref<72x256xbf16, #tpu.memory_space<vmem>>, vector<8x256xbf16>,
    %c0_97 = arith.constant 0 : index
    %c32_98 = arith.constant 32 : index
    %100 = vector.load %arg12[%c0_97, %c32_98] : memref<8x290xbf16, #tpu.memory_space<vmem>>, vector<8x256xbf16>
    %c6_99 = arith.constant 6 : index
    %c0_100 = arith.constant 0 : index
    %101 = vector.load %arg4[%c6_99, %c0_100] : memref<9x256xbf16, #tpu.memory_space<vmem>>, vector<1x256xbf16>
    %102 = vector.broadcast %101 : vector<1x256xbf16> to vector<8x256xbf16>
    %103 = arith.mulf %100, %102 : vector<8x256xbf16>
    %c48_101 = arith.constant 48 : index
    %c0_102 = arith.constant 0 : index
    %104 = vector.load %arg13[%c48_101, %c0_102] : memref<72x256xbf16, #tpu.memory_space<vmem>>, vector<8x256xbf16>
    tpu.vector_store %arg13[%c48_101, %c0_102], %103 {strides = array<i32>} : memref<72x256xbf16, #tpu.memory_space<vmem>>, vector<8x256xbf16>,
    %c0_103 = arith.constant 0 : index
    %c33_104 = arith.constant 33 : index
    %105 = vector.load %arg12[%c0_103, %c33_104] : memref<8x290xbf16, #tpu.memory_space<vmem>>, vector<8x256xbf16>
    %c7_105 = arith.constant 7 : index
    %c0_106 = arith.constant 0 : index
    %106 = vector.load %arg4[%c7_105, %c0_106] : memref<9x256xbf16, #tpu.memory_space<vmem>>, vector<1x256xbf16>
    %107 = vector.broadcast %106 : vector<1x256xbf16> to vector<8x256xbf16>
    %108 = arith.mulf %105, %107 : vector<8x256xbf16>
    %c56_107 = arith.constant 56 : index
    %c0_108 = arith.constant 0 : index
    %109 = vector.load %arg13[%c56_107, %c0_108] : memref<72x256xbf16, #tpu.memory_space<vmem>>, vector<8x256xbf16>
    tpu.vector_store %arg13[%c56_107, %c0_108], %108 {strides = array<i32>} : memref<72x256xbf16, #tpu.memory_space<vmem>>, vector<8x256xbf16>,
    %c0_109 = arith.constant 0 : index
    %c34_110 = arith.constant 34 : index
    %110 = vector.load %arg12[%c0_109, %c34_110] : memref<8x290xbf16, #tpu.memory_space<vmem>>, vector<8x256xbf16>
    %c8_111 = arith.constant 8 : index
    %c0_112 = arith.constant 0 : index
    %111 = vector.load %arg4[%c8_111, %c0_112] : memref<9x256xbf16, #tpu.memory_space<vmem>>, vector<1x256xbf16>
    %112 = vector.broadcast %111 : vector<1x256xbf16> to vector<8x256xbf16>
    %113 = arith.mulf %110, %112 : vector<8x256xbf16>
    %c64_113 = arith.constant 64 : index
    %c0_114 = arith.constant 0 : index
    %114 = vector.load %arg13[%c64_113, %c0_114] : memref<72x256xbf16, #tpu.memory_space<vmem>>, vector<8x256xbf16>
    tpu.vector_store %arg13[%c64_113, %c0_114], %113 {strides = array<i32>} : memref<72x256xbf16, #tpu.memory_space<vmem>>, vector<8x256xbf16>,
    %c0_115 = arith.constant 0 : index
    %c0_116 = arith.constant 0 : index
    %115 = vector.load %arg8[%c0_115, %c0_116] : memref<8x72xbf16, #tpu.memory_space<vmem>>, vector<8x72xbf16>
    %c0_117 = arith.constant 0 : index
    %c0_118 = arith.constant 0 : index
    %116 = vector.load %arg13[%c0_117, %c0_118] : memref<72x256xbf16, #tpu.memory_space<vmem>>, vector<72x256xbf16>
    %cst_119 = arith.constant dense<0.000000e+00> : vector<8x256xf32>
    %117 = tpu.matmul %115, %116, %cst_119 {dimension_numbers = #tpu.dot_dimension_numbers<[1], [0], [0], [1], [0, 0, 1, 1], [], []>} : vector<8x72xbf16>, vector<72x256xbf16>, vector<8x256xf32> -> vector<8x256xf32>
    %c0_120 = arith.constant 0 : index
    %c0_121 = arith.constant 0 : index
    %118 = vector.load %arg9[%c0_120, %c0_121] : memref<8x1xf32, #tpu.memory_space<vmem>>, vector<8x1xf32>
    %119 = vector.broadcast %118 : vector<8x1xf32> to vector<8x256xf32>
    %120 = arith.mulf %117, %119 : vector<8x256xf32>
    %c0_122 = arith.constant 0 : index
    %c0_123 = arith.constant 0 : index
    %121 = vector.load %arg10[%c0_122, %c0_123] : memref<8x1xf32, #tpu.memory_space<vmem>>, vector<8x1xf32>
    %122 = vector.broadcast %121 : vector<8x1xf32> to vector<8x256xf32>
    %123 = arith.addf %120, %122 : vector<8x256xf32>
    %cst_124 = arith.constant 0.000000e+00 : f32
    %124 = vector.broadcast %cst_124 : f32 to vector<8x256xf32>
    %125 = arith.maximumf %123, %124 : vector<8x256xf32>
    %c0_125 = arith.constant 0 : index
    %c0_126 = arith.constant 0 : index
    %c0_127 = arith.constant 0 : index
    %126 = vector.load %arg11[%c0_125, %c0_126, %c0_127] : memref<1x8x256xf32, #tpu.memory_space<vmem>>, vector<1x8x256xf32>
    %127 = vector.shape_cast %126 : vector<1x8x256xf32> to vector<8x256xf32>
    %128 = vector.shape_cast %125 : vector<8x256xf32> to vector<1x8x256xf32>
    tpu.vector_store %arg11[%c0_125, %c0_126, %c0_127], %128 {strides = array<i32>} : memref<1x8x256xf32, #tpu.memory_space<vmem>>, vector<1x8x256xf32>,
    return
  }
  func.func @transform_0(%arg0: i32) -> (i32, i32, i32) {
    %c0_i32 = arith.constant 0 : i32
    %c0_i32_0 = arith.constant 0 : i32
    %c0_i32_1 = arith.constant 0 : i32
    return %arg0, %c0_i32, %c0_i32_0 : i32, i32, i32
  }
  func.func @transform_1(%arg0: i32) -> (i32, i32, i32) {
    %c0_i32 = arith.constant 0 : i32
    %c0_i32_0 = arith.constant 0 : i32
    %c0_i32_1 = arith.constant 0 : i32
    return %arg0, %c0_i32, %c0_i32_0 : i32, i32, i32
  }
  func.func @transform_2(%arg0: i32) -> (i32, i32) {
    %c0_i32 = arith.constant 0 : i32
    %c0_i32_0 = arith.constant 0 : i32
    %c0_i32_1 = arith.constant 0 : i32
    return %c0_i32, %c0_i32_0 : i32, i32
  }
  func.func @transform_3(%arg0: i32) -> (i32, i32) {
    %c0_i32 = arith.constant 0 : i32
    %c0_i32_0 = arith.constant 0 : i32
    %c0_i32_1 = arith.constant 0 : i32
    return %c0_i32, %c0_i32_0 : i32, i32
  }
  func.func @transform_4(%arg0: i32) -> (i32, i32) {
    %c0_i32 = arith.constant 0 : i32
    %c0_i32_0 = arith.constant 0 : i32
    %c0_i32_1 = arith.constant 0 : i32
    return %c0_i32, %c0_i32_0 : i32, i32
  }
  func.func @transform_5(%arg0: i32) -> (i32, i32) {
    %c0_i32 = arith.constant 0 : i32
    %c0_i32_0 = arith.constant 0 : i32
    %c0_i32_1 = arith.constant 0 : i32
    return %c0_i32, %c0_i32_0 : i32, i32
  }
  func.func @transform_6(%arg0: i32) -> (i32, i32) {
    %c0_i32 = arith.constant 0 : i32
    %c0_i32_0 = arith.constant 0 : i32
    %c0_i32_1 = arith.constant 0 : i32
    return %c0_i32, %c0_i32_0 : i32, i32
  }
  func.func @transform_7(%arg0: i32) -> (i32, i32) {
    %c0_i32 = arith.constant 0 : i32
    %c0_i32_0 = arith.constant 0 : i32
    %c0_i32_1 = arith.constant 0 : i32
    return %c0_i32, %c0_i32_0 : i32, i32
  }
  func.func @transform_8(%arg0: i32) -> (i32, i32) {
    %c0_i32 = arith.constant 0 : i32
    %c0_i32_0 = arith.constant 0 : i32
    %c0_i32_1 = arith.constant 0 : i32
    return %c0_i32, %c0_i32_0 : i32, i32
  }
  func.func @transform_9(%arg0: i32) -> (i32, i32) {
    %c0_i32 = arith.constant 0 : i32
    %c0_i32_0 = arith.constant 0 : i32
    %c0_i32_1 = arith.constant 0 : i32
    return %c0_i32, %c0_i32_0 : i32, i32
  }
  func.func @transform_10(%arg0: i32) -> (i32, i32, i32) {
    %c0_i32 = arith.constant 0 : i32
    %c0_i32_0 = arith.constant 0 : i32
    %c0_i32_1 = arith.constant 0 : i32
    return %arg0, %c0_i32, %c0_i32_0 : i32, i32, i32
  }
}

</mosaic_0001>

<llo_original>
// kernel: up_forward.1
$region0: #{up_forward.1}
  #allocation0 [shape = 'u32[]', space=smem, size = 0x4, offset = 0x4, fixed_abs, tag = 'smem constant byte address 0x4 - core index']
  #allocation1 [shape = 'u32[144,128]{1,0:T(1,128)}', space=vmem, size = 0x12000, scoped, tag = 'internal scratch']
  #allocation2 [shape = 'bf16[8,290]{1,0:T(8,128)(2,1)}', space=vmem, size = 0x1800, scoped, tag = 'scratch operand']
  #allocation3 [shape = 'bf16[72,256]{1,0:T(8,128)(2,1)}', space=vmem, size = 0x9000, scoped, tag = 'scratch operand']
  %s0 = inlined_call_operand.vmem [shape: f32[2,4,64], index: 0, kind: input, shape index: {}]
  %s1 = inlined_call_operand.vmem [shape: f32[2,4,256], index: 1, kind: input, shape index: {}]
  %s2 = inlined_call_operand.vmem [shape: f32[64,256], index: 2, kind: input, shape index: {}]
  %s3 = inlined_call_operand.vmem [shape: bf16[9,256], index: 3, kind: input, shape index: {}]
  %s4 = inlined_call_operand.vmem [shape: bf16[8,72], index: 4, kind: input, shape index: {}]
  %s5 = inlined_call_operand.vmem [shape: f32[8,1], index: 5, kind: input, shape index: {}]
  %s6 = inlined_call_operand.vmem [shape: f32[8,1], index: 6, kind: input, shape index: {}]
  %s7 = inlined_call_operand.vmem [shape: bf16[8,72], index: 7, kind: input, shape index: {}]
  %s8 = inlined_call_operand.vmem [shape: f32[8,1], index: 8, kind: input, shape index: {}]
  %s9 = inlined_call_operand.vmem [shape: f32[8,1], index: 9, kind: input, shape index: {}]
  %s10 = inlined_call_operand.vmem [shape: f32[2,8,256], index: 10, kind: output, shape index: {}]
  %s11 = sld [smem:[#allocation0]]
  $region73: #{up_forward.1} parent=0
    _
  %s13 = ssub.s32 1, %s11
  %s14 = scalar_select 0, %s13, %s11
  loop: start=0, step=1, limit=4
  $region2: #{up_forward.1} parent=0 // loop_pre_header
    _
  $region3: #{up_forward.1} parent=0 // loop_header
    %s16 = sphi 0, %s20
    %p17 = scmp.ge.s32.totalorder %s16, 4
    %s26 = sphi 0, %s28
    %s29 = sphi 0, %s26
    %s30 = sphi 0, %s29
    %s46 = sphi 0, %s30
    %s52 = sphi 0, %s54
    %s55 = sphi 0, %s52
    %s56 = sphi 0, %s55
    %s72 = sphi 0, %s56
    %s76 = sphi 0, %s76
    %s78 = sphi 0, %s76
    %s79 = sphi 0, %s78
    %s93 = sphi 0, %s79
    %s97 = sphi 0, %s97
    %s99 = sphi 0, %s97
    %s100 = sphi 0, %s99
    %s114 = sphi 0, %s100
    %s118 = sphi 0, %s118
    %s120 = sphi 0, %s118
    %s121 = sphi 0, %s120
    %s135 = sphi 0, %s121
    %s139 = sphi 0, %s139
    %s141 = sphi 0, %s139
    %s142 = sphi 0, %s141
    %s156 = sphi 0, %s142
    %s160 = sphi 0, %s160
    %s162 = sphi 0, %s160
    %s163 = sphi 0, %s162
    %s177 = sphi 0, %s163
    %s181 = sphi 0, %s181
    %s183 = sphi 0, %s181
    %s184 = sphi 0, %s183
    %s198 = sphi 0, %s184
    %s202 = sphi 0, %s202
    %s204 = sphi 0, %s202
    %s205 = sphi 0, %s204
    %s219 = sphi 0, %s205
    %s223 = sphi 0, %s223
    %s225 = sphi 0, %s223
    %s226 = sphi 0, %s225
    %s240 = sphi 0, %s226
    %s246 = sphi 0, %s248
    %s249 = sphi 0, %s246
    %s250 = sphi 0, %s249
    %s266 = sphi 0, %s250
  $region4: #{up_forward.1} parent=0 // loop_header_branch
    %19 = sbr.rel (%p17) target = $region8
  $region5: #{up_forward.1} parent=0 // loop_body
    %s21 = ssub.s32 %s16, 1
    %s22 = ssub.s32 %s16, 2
    %s23 = sadd.s32 %s16, 1
    %s24 = ssub.s32 %s16, %s23
    %p25 = scmp.eq.s32.totalorder %s24, 0
    %s27 = sadd.s32 %s26, 1
    %s28 = scalar_select %p25, %s26, %s27
    %p31 = pneg %p25
    %p32 = scmp.eq.s32.totalorder %s16, 1
    %p33 = por %p31, %p32
    %p34 = scmp.ne.s32.totalorder %s26, %s29
    %p35 = scmp.eq.s32.totalorder %s16, 0
    %p36 = por %p34, %p35
    %p37 = scmp.ne.s32.totalorder %s26, %s29
    %p38 = scmp.eq.s32.totalorder %s21, 1
    %p39 = por %p37, %p38
    %p40 = scmp.ne.s32.totalorder %s29, %s30
    %p41 = scmp.eq.s32.totalorder %s21, 0
    %p42 = por %p40, %p41
    %p43 = scmp.ne.s32.totalorder %s29, %s30
    %p44 = scmp.eq.s32.totalorder %s22, 1
    %p45 = por %p43, %p44
    %p47 = scmp.ne.s32.totalorder %s30, %s46
    %p48 = scmp.eq.s32.totalorder %s22, 0
    %p49 = por %p47, %p48
    %s50 = ssub.s32 %s16, %s23
    %p51 = scmp.eq.s32.totalorder %s50, 0
    %s53 = sadd.s32 %s52, 1
    %s54 = scalar_select %p51, %s52, %s53
    %p57 = pneg %p51
    %p58 = scmp.eq.s32.totalorder %s16, 1
    %p59 = por %p57, %p58
    %p60 = scmp.ne.s32.totalorder %s52, %s55
    %p61 = scmp.eq.s32.totalorder %s16, 0
    %p62 = por %p60, %p61
    %p63 = scmp.ne.s32.totalorder %s52, %s55
    %p64 = scmp.eq.s32.totalorder %s21, 1
    %p65 = por %p63, %p64
    %p66 = scmp.ne.s32.totalorder %s55, %s56
    %p67 = scmp.eq.s32.totalorder %s21, 0
    %p68 = por %p66, %p67
    %p69 = scmp.ne.s32.totalorder %s55, %s56
    %p70 = scmp.eq.s32.totalorder %s22, 1
    %p71 = por %p69, %p70
    %p73 = scmp.ne.s32.totalorder %s56, %s72
    %p74 = scmp.eq.s32.totalorder %s22, 0
    %p75 = por %p73, %p74
    %s77 = sadd.s32 %s76, 1
    %p80 = scmp.eq.s32.totalorder %s16, 1
    %p81 = scmp.ne.s32.totalorder %s76, %s78
    %p82 = scmp.eq.s32.totalorder %s16, 0
    %p83 = por %p81, %p82
    %p84 = scmp.ne.s32.totalorder %s76, %s78
    %p85 = scmp.eq.s32.totalorder %s21, 1
    %p86 = por %p84, %p85
    %p87 = scmp.ne.s32.totalorder %s78, %s79
    %p88 = scmp.eq.s32.totalorder %s21, 0
    %p89 = por %p87, %p88
    %p90 = scmp.ne.s32.totalorder %s78, %s79
    %p91 = scmp.eq.s32.totalorder %s22, 1
    %p92 = por %p90, %p91
    %p94 = scmp.ne.s32.totalorder %s79, %s93
    %p95 = scmp.eq.s32.totalorder %s22, 0
    %p96 = por %p94, %p95
    %s98 = sadd.s32 %s97, 1
    %p101 = scmp.eq.s32.totalorder %s16, 1
    %p102 = scmp.ne.s32.totalorder %s97, %s99
    %p103 = scmp.eq.s32.totalorder %s16, 0
    %p104 = por %p102, %p103
    %p105 = scmp.ne.s32.totalorder %s97, %s99
    %p106 = scmp.eq.s32.totalorder %s21, 1
    %p107 = por %p105, %p106
    %p108 = scmp.ne.s32.totalorder %s99, %s100
    %p109 = scmp.eq.s32.totalorder %s21, 0
    %p110 = por %p108, %p109
    %p111 = scmp.ne.s32.totalorder %s99, %s100
    %p112 = scmp.eq.s32.totalorder %s22, 1
    %p113 = por %p111, %p112
    %p115 = scmp.ne.s32.totalorder %s100, %s114
    %p116 = scmp.eq.s32.totalorder %s22, 0
    %p117 = por %p115, %p116
    %s119 = sadd.s32 %s118, 1
    %p122 = scmp.eq.s32.totalorder %s16, 1
    %p123 = scmp.ne.s32.totalorder %s118, %s120
    %p124 = scmp.eq.s32.totalorder %s16, 0
    %p125 = por %p123, %p124
    %p126 = scmp.ne.s32.totalorder %s118, %s120
    %p127 = scmp.eq.s32.totalorder %s21, 1
    %p128 = por %p126, %p127
    %p129 = scmp.ne.s32.totalorder %s120, %s121
    %p130 = scmp.eq.s32.totalorder %s21, 0
    %p131 = por %p129, %p130
    %p132 = scmp.ne.s32.totalorder %s120, %s121
    %p133 = scmp.eq.s32.totalorder %s22, 1
    %p134 = por %p132, %p133
    %p136 = scmp.ne.s32.totalorder %s121, %s135
    %p137 = scmp.eq.s32.totalorder %s22, 0
    %p138 = por %p136, %p137
    %s140 = sadd.s32 %s139, 1
    %p143 = scmp.eq.s32.totalorder %s16, 1
    %p144 = scmp.ne.s32.totalorder %s139, %s141
    %p145 = scmp.eq.s32.totalorder %s16, 0
    %p146 = por %p144, %p145
    %p147 = scmp.ne.s32.totalorder %s139, %s141
    %p148 = scmp.eq.s32.totalorder %s21, 1
    %p149 = por %p147, %p148
    %p150 = scmp.ne.s32.totalorder %s141, %s142
    %p151 = scmp.eq.s32.totalorder %s21, 0
    %p152 = por %p150, %p151
    %p153 = scmp.ne.s32.totalorder %s141, %s142
    %p154 = scmp.eq.s32.totalorder %s22, 1
    %p155 = por %p153, %p154
    %p157 = scmp.ne.s32.totalorder %s142, %s156
    %p158 = scmp.eq.s32.totalorder %s22, 0
    %p159 = por %p157, %p158
    %s161 = sadd.s32 %s160, 1
    %p164 = scmp.eq.s32.totalorder %s16, 1
    %p165 = scmp.ne.s32.totalorder %s160, %s162
    %p166 = scmp.eq.s32.totalorder %s16, 0
    %p167 = por %p165, %p166
    %p168 = scmp.ne.s32.totalorder %s160, %s162
    %p169 = scmp.eq.s32.totalorder %s21, 1
    %p170 = por %p168, %p169
    %p171 = scmp.ne.s32.totalorder %s162, %s163
    %p172 = scmp.eq.s32.totalorder %s21, 0
    %p173 = por %p171, %p172
    %p174 = scmp.ne.s32.totalorder %s162, %s163
    %p175 = scmp.eq.s32.totalorder %s22, 1
    %p176 = por %p174, %p175
    %p178 = scmp.ne.s32.totalorder %s163, %s177
    %p179 = scmp.eq.s32.totalorder %s22, 0
    %p180 = por %p178, %p179
    %s182 = sadd.s32 %s181, 1
    %p185 = scmp.eq.s32.totalorder %s16, 1
    %p186 = scmp.ne.s32.totalorder %s181, %s183
    %p187 = scmp.eq.s32.totalorder %s16, 0
    %p188 = por %p186, %p187
    %p189 = scmp.ne.s32.totalorder %s181, %s183
    %p190 = scmp.eq.s32.totalorder %s21, 1
    %p191 = por %p189, %p190
    %p192 = scmp.ne.s32.totalorder %s183, %s184
    %p193 = scmp.eq.s32.totalorder %s21, 0
    %p194 = por %p192, %p193
    %p195 = scmp.ne.s32.totalorder %s183, %s184
    %p196 = scmp.eq.s32.totalorder %s22, 1
    %p197 = por %p195, %p196
    %p199 = scmp.ne.s32.totalorder %s184, %s198
    %p200 = scmp.eq.s32.totalorder %s22, 0
    %p201 = por %p199, %p200
    %s203 = sadd.s32 %s202, 1
    %p206 = scmp.eq.s32.totalorder %s16, 1
    %p207 = scmp.ne.s32.totalorder %s202, %s204
    %p208 = scmp.eq.s32.totalorder %s16, 0
    %p209 = por %p207, %p208
    %p210 = scmp.ne.s32.totalorder %s202, %s204
    %p211 = scmp.eq.s32.totalorder %s21, 1
    %p212 = por %p210, %p211
    %p213 = scmp.ne.s32.totalorder %s204, %s205
    %p214 = scmp.eq.s32.totalorder %s21, 0
    %p215 = por %p213, %p214
    %p216 = scmp.ne.s32.totalorder %s204, %s205
    %p217 = scmp.eq.s32.totalorder %s22, 1
    %p218 = por %p216, %p217
    %p220 = scmp.ne.s32.totalorder %s205, %s219
    %p221 = scmp.eq.s32.totalorder %s22, 0
    %p222 = por %p220, %p221
    %s224 = sadd.s32 %s223, 1
    %p227 = scmp.eq.s32.totalorder %s16, 1
    %p228 = scmp.ne.s32.totalorder %s223, %s225
    %p229 = scmp.eq.s32.totalorder %s16, 0
    %p230 = por %p228, %p229
    %p231 = scmp.ne.s32.totalorder %s223, %s225
    %p232 = scmp.eq.s32.totalorder %s21, 1
    %p233 = por %p231, %p232
    %p234 = scmp.ne.s32.totalorder %s225, %s226
    %p235 = scmp.eq.s32.totalorder %s21, 0
    %p236 = por %p234, %p235
    %p237 = scmp.ne.s32.totalorder %s225, %s226
    %p238 = scmp.eq.s32.totalorder %s22, 1
    %p239 = por %p237, %p238
    %p241 = scmp.ne.s32.totalorder %s226, %s240
    %p242 = scmp.eq.s32.totalorder %s22, 0
    %p243 = por %p241, %p242
    %s244 = ssub.s32 %s16, %s23
    %p245 = scmp.eq.s32.totalorder %s244, 0
    %s247 = sadd.s32 %s246, 1
    %s248 = scalar_select %p245, %s246, %s247
    %p251 = pneg %p245
    %p252 = scmp.eq.s32.totalorder %s16, 1
    %p253 = por %p251, %p252
    %p254 = scmp.ne.s32.totalorder %s246, %s249
    %p255 = scmp.eq.s32.totalorder %s16, 0
    %p256 = por %p254, %p255
    %p257 = scmp.ne.s32.totalorder %s246, %s249
    %p258 = scmp.eq.s32.totalorder %s21, 1
    %p259 = por %p257, %p258
    %p260 = scmp.ne.s32.totalorder %s249, %s250
    %p261 = scmp.eq.s32.totalorder %s21, 0
    %p262 = por %p260, %p261
    %p263 = scmp.ne.s32.totalorder %s249, %s250
    %p264 = scmp.eq.s32.totalorder %s22, 1
    %p265 = por %p263, %p264
    %p267 = scmp.ne.s32.totalorder %s250, %s266
    %p268 = scmp.eq.s32.totalorder %s22, 0
    %p269 = por %p267, %p268
    %p270 = scmp.le.s32.totalorder 1, %s16
    %p271 = scmp.lt.s32.totalorder %s16, 3
    %p272 = pnand %p270, %p271
    %p273 = pneg %p272
    // Predicated region
    $region9: #{up_forward.1} parent=5 // pred_check
      _
    $region10: #{up_forward.1} parent=5 // pred_check_branch
      %275 = sbr.rel (%p272) target = $region12
    $region11: #{up_forward.1} parent=5 // pred_region
      %s276 = ssub.s32 %s16, 1
      // Predicated region
      $region13: #{up_forward.1} parent=11 // pred_check
        %p277 = pneg %p89
      $region14: #{up_forward.1} parent=11 // pred_check_branch
        %279 = sbr.rel (%p277) target = $region16
      $region15: #{up_forward.1} parent=11 // pred_region
        _
      $region16: #{up_forward.1} parent=11 // pred_fallthru
        _
      // Predicated region
      $region17: #{up_forward.1} parent=11 // pred_check
        %p280 = pneg %p110
      $region18: #{up_forward.1} parent=11 // pred_check_branch
        %282 = sbr.rel (%p280) target = $region20
      $region19: #{up_forward.1} parent=11 // pred_region
        _
      $region20: #{up_forward.1} parent=11 // pred_fallthru
        _
      // Predicated region
      $region21: #{up_forward.1} parent=11 // pred_check
        %p283 = pneg %p131
      $region22: #{up_forward.1} parent=11 // pred_check_branch
        %285 = sbr.rel (%p283) target = $region24
      $region23: #{up_forward.1} parent=11 // pred_region
        _
      $region24: #{up_forward.1} parent=11 // pred_fallthru
        _
      // Predicated region
      $region25: #{up_forward.1} parent=11 // pred_check
        %p286 = pneg %p152
      $region26: #{up_forward.1} parent=11 // pred_check_branch
        %288 = sbr.rel (%p286) target = $region28
      $region27: #{up_forward.1} parent=11 // pred_region
        _
      $region28: #{up_forward.1} parent=11 // pred_fallthru
        _
      // Predicated region
      $region29: #{up_forward.1} parent=11 // pred_check
        %p289 = pneg %p173
      $region30: #{up_forward.1} parent=11 // pred_check_branch
        %291 = sbr.rel (%p289) target = $region32
      $region31: #{up_forward.1} parent=11 // pred_region
        _
      $region32: #{up_forward.1} parent=11 // pred_fallthru
        _
      // Predicated region
      $region33: #{up_forward.1} parent=11 // pred_check
        %p292 = pneg %p194
      $region34: #{up_forward.1} parent=11 // pred_check_branch
        %294 = sbr.rel (%p292) target = $region36
      $region35: #{up_forward.1} parent=11 // pred_region
        _
      $region36: #{up_forward.1} parent=11 // pred_fallthru
        _
      // Predicated region
      $region37: #{up_forward.1} parent=11 // pred_check
        %p295 = pneg %p215
      $region38: #{up_forward.1} parent=11 // pred_check_branch
        %297 = sbr.rel (%p295) target = $region40
      $region39: #{up_forward.1} parent=11 // pred_region
        _
      $region40: #{up_forward.1} parent=11 // pred_fallthru
        _
      // Predicated region
      $region41: #{up_forward.1} parent=11 // pred_check
        %p298 = pneg %p236
      $region42: #{up_forward.1} parent=11 // pred_check_branch
        %300 = sbr.rel (%p298) target = $region44
      $region43: #{up_forward.1} parent=11 // pred_region
        _
      $region44: #{up_forward.1} parent=11 // pred_fallthru
        _
    $region12: #{up_forward.1} parent=5 // pred_fallthru
      _
    %p301 = scmp.lt.s32.totalorder %s16, 2
    // Predicated region
    $region45: #{up_forward.1} parent=5 // pred_check
      %p302 = pneg %p301
    $region46: #{up_forward.1} parent=5 // pred_check_branch
      %304 = sbr.rel (%p302) target = $region48
    $region47: #{up_forward.1} parent=5 // pred_region
      // Predicated region
      $region49: #{up_forward.1} parent=47 // pred_check
        %p305 = pneg %p36
      $region50: #{up_forward.1} parent=47 // pred_check_branch
        %307 = sbr.rel (%p305) target = $region52
      $region51: #{up_forward.1} parent=47 // pred_region
        %p308 = scmp.lt.s32.totalorder %s16, 1
        %s309 = scalar_select %p308, %s16, 1
        %s310 = smul.addr %s309, 4
        %s311 = scalar_lea.vmem %s0, %s310
      $region52: #{up_forward.1} parent=47 // pred_fallthru
        _
      // Predicated region
      $region53: #{up_forward.1} parent=47 // pred_check
        %p312 = pneg %p62
      $region54: #{up_forward.1} parent=47 // pred_check_branch
        %314 = sbr.rel (%p312) target = $region56
      $region55: #{up_forward.1} parent=47 // pred_region
        %p315 = scmp.lt.s32.totalorder %s16, 1
        %s316 = scalar_select %p315, %s16, 1
        %s317 = smul.addr %s316, 2
        %s318 = smul.addr %s317, 4
        %s319 = scalar_lea.vmem %s1, %s318
      $region56: #{up_forward.1} parent=47 // pred_fallthru
        _
    $region48: #{up_forward.1} parent=5 // pred_fallthru
      _
    %p320 = scmp.le.s32.totalorder 1, %s16
    %p321 = scmp.lt.s32.totalorder %s16, 3
    %p322 = pnand %p320, %p321
    %p323 = pneg %p322
    // Predicated region
    $region57: #{up_forward.1} parent=5 // pred_check
      _
    $region58: #{up_forward.1} parent=5 // pred_check_branch
      %325 = sbr.rel (%p322) target = $region60
    $region59: #{up_forward.1} parent=5 // pred_region
      %s326 = ssub.s32 %s16, 1
      %p327 = scmp.lt.s32.totalorder %s21, 1
      %s328 = scalar_select %p327, %s21, 1
      %s329 = smul.addr %s328, 4
      %s330 = scalar_lea.vmem %s0, %s329
      %p331 = pneg %p42
      %p332 = pneg %p39
      %p333 = scmp.lt.s32.totalorder %s21, 1
      %s334 = scalar_select %p333, %s21, 1
      %s335 = smul.addr %s334, 2
      %s336 = smul.addr %s335, 4
      %s337 = scalar_lea.vmem %s1, %s336
      %p338 = pneg %p68
      %p339 = pneg %p65
      %p340 = pneg %p89
      %p341 = pneg %p86
      %p342 = pneg %p110
      %p343 = pneg %p107
      %p344 = pneg %p131
      %p345 = pneg %p128
      %p346 = pneg %p152
      %p347 = pneg %p149
      %p348 = pneg %p173
      %p349 = pneg %p170
      %p350 = pneg %p194
      %p351 = pneg %p191
      %p352 = pneg %p215
      %p353 = pneg %p212
      %p354 = pneg %p236
      %p355 = pneg %p233
      %p356 = pneg %p262
      %p357 = pneg %p259
      %p358 = scmp.lt.s32.totalorder %s21, 1
      %s359 = scalar_select %p358, %s21, 1
      %s360 = smul.addr %s359, 2
      %s361 = smul.addr %s360, 8
      %s362 = scalar_lea.vmem %s10, %s361
      %p363 = scmp.lt.s32.totalorder %s21, 1
      %s364 = scalar_select %p363, %s21, 1
      %s365 = smul.addr %s364, 4
      %s366 = scalar_lea.vmem %s0, %s365
      %p367 = scmp.lt.s32.totalorder %s21, 1
      %s368 = scalar_select %p367, %s21, 1
      %s369 = smul.addr %s368, 2
      %s370 = smul.addr %s369, 4
      %s371 = scalar_lea.vmem %s1, %s370
      %p372 = scmp.lt.s32.totalorder %s21, 1
      %s373 = scalar_select %p372, %s21, 1
      %s374 = smul.addr %s373, 2
      %s375 = smul.addr %s374, 8
      %s376 = scalar_lea.vmem %s10, %s375
      %378 = vst [vmem:[#allocation2] sm:$0xff] 0
      %vm379 = vcmask 273408
      %380 = vst.msk [vmem:[#allocation2 + $0x8] sm:$0xf] %vm379, 0
      %v381 = vld [vmem:[%s371] sm:$0xff]
      %v383 = vcombine.high %v381, %v381
      %v385 = vpack.c.bf16 %v381, %v381
      %v386 = vpack.c.bf16 %v383, %v383
      %v389 = vunpack.c.l.b16 %v385
      %v390 = vunpack.c.l.b16 %v386
      %v391 = vpack.c.b16 %v390, %v389
      %392 = vrot.lane.b32.xlu0 %v391, 17
      %v393 = vpop.permute.xlu0 %392
      %v394 = vrot.slane %v393, 4
      %vm395 = vcmask 138240
      %v396 = vsel %vm395, %v394, %v393
      %vm399 = vcmask 1041544
      %vm400 = vcmask 1045508
      %vm401 = vmor %vm400, %vm399
      %402 = vst.msk [vmem:[#allocation2] sm:$0x33] %vm401, %v396
      %vm403 = vcmask 132096
      %404 = vst.msk [vmem:[#allocation2 + $0x8] sm:$0x3] %vm403, %v394
      %v405 = vld [vmem:[%s366] sm:$0xf]
      %v406 = vld [vmem:[%s2] sm:$0xff]
      %v407 = vld [vmem:[%s2 + $0x8] sm:$0xff]
      %v408 = vld [vmem:[%s2 + $0x10] sm:$0xff]
      %v409 = vld [vmem:[%s2 + $0x18] sm:$0xff]
      %v410 = vld [vmem:[%s2 + $0x20] sm:$0xff]
      %v411 = vld [vmem:[%s2 + $0x28] sm:$0xff]
      %v412 = vld [vmem:[%s2 + $0x30] sm:$0xff]
      %v413 = vld [vmem:[%s2 + $0x38] sm:$0xff]
      %v414 = vld [vmem:[%s2 + $0x40] sm:$0xff]
      %v415 = vld [vmem:[%s2 + $0x48] sm:$0xff]
      %v416 = vld [vmem:[%s2 + $0x50] sm:$0xff]
      %v417 = vld [vmem:[%s2 + $0x58] sm:$0xff]
      %v418 = vld [vmem:[%s2 + $0x60] sm:$0xff]
      %v419 = vld [vmem:[%s2 + $0x68] sm:$0xff]
      %v420 = vld [vmem:[%s2 + $0x70] sm:$0xff]
      %v421 = vld [vmem:[%s2 + $0x78] sm:$0xff]
      %vm422 = vcmask 523264
      %v424 = vsel %vm422, %v405, 0
      %426 = vmatprep.subr.mxu0 0.0
      %427 = vmatpush1.msra.mxu0 0.0
      %428 = vmatprep.subr.mxu0 0.0
      %429 = vmatpush1.msra.mxu0 0.0
      %430 = vmatprep.subr.mxu0 0.0
      %431 = vmatpush1.msra.mxu0 0.0
      %432 = vmatprep.subr.mxu0 0.0
      %433 = vmatpush1.msra.mxu0 0.0
      %434 = vmatprep.subr.mxu0 0.0
      %435 = vmatpush1.msra.mxu0 0.0
      %436 = vmatprep.subr.mxu0 0.0
      %437 = vmatpush1.msra.mxu0 0.0
      %438 = vmatprep.subr.mxu0 0.0
      %439 = vmatpush1.msra.mxu0 0.0
      %440 = vmatprep.subr.mxu0 0.0
      %441 = vmatpush1.msra.mxu0 0.0
      %442 = vmatprep.subr.mxu0 %v421
      %443 = vmatpush1.msra.mxu0 %v420
      %444 = vmatprep.subr.mxu0 %v419
      %445 = vmatpush1.msra.mxu0 %v418
      %446 = vmatprep.subr.mxu0 %v417
      %447 = vmatpush1.msra.mxu0 %v416
      %448 = vmatprep.subr.mxu0 %v415
      %449 = vmatpush1.msra.mxu0 %v414
      %450 = vmatprep.subr.mxu0 %v413
      %451 = vmatpush1.msra.mxu0 %v412
      %452 = vmatprep.subr.mxu0 %v411
      %453 = vmatpush1.msra.mxu0 %v410
      %454 = vmatprep.subr.mxu0 %v409
      %455 = vmatpush1.msra.mxu0 %v408
      %456 = vmatprep.subr.mxu0 %v407
      %457 = vmatpush1.msra.mxu0 %v406
      %458 = vmatprep.subr.mxu0 0.0
      %459 = vmatpush2.msra.mxu0 0.0
      %460 = vmatprep.subr.mxu0 0.0
      %461 = vmatpush2.msra.mxu0 0.0
      %462 = vmatprep.subr.mxu0 0.0
      %463 = vmatpush2.msra.mxu0 0.0
      %464 = vmatprep.subr.mxu0 0.0
      %465 = vmatpush2.msra.mxu0 0.0
      %466 = vmatprep.subr.mxu0 0.0
      %467 = vmatpush2.msra.mxu0 0.0
      %468 = vmatprep.subr.mxu0 0.0
      %469 = vmatpush2.msra.mxu0 0.0
      %470 = vmatprep.subr.mxu0 0.0
      %471 = vmatpush2.msra.mxu0 0.0
      %472 = vmatprep.subr.mxu0 0.0
      %473 = vmatpush2.msra.mxu0 0.0
      %474 = vmatprep.subr.mxu0 0.0
      %475 = vmatpush2.msra.mxu0 0.0
      %476 = vmatprep.subr.mxu0 0.0
      %477 = vmatpush2.msra.mxu0 0.0
      %478 = vmatprep.subr.mxu0 0.0
      %479 = vmatpush2.msra.mxu0 0.0
      %480 = vmatprep.subr.mxu0 0.0
      %481 = vmatpush2.msra.mxu0 0.0
      %482 = vmatprep.subr.mxu0 0.0
      %483 = vmatpush2.msra.mxu0 0.0
      %484 = vmatprep.subr.mxu0 0.0
      %485 = vmatpush2.msra.mxu0 0.0
      %486 = vmatprep.subr.mxu0 0.0
      %487 = vmatpush2.msra.mxu0 0.0
      %488 = vmatprep.subr.mxu0 0.0
      %489 = vmatpush2.msra.mxu0 0.0
      %490 = vmatprep.mubr.f32.mxu0 0.0
      %491 = vmatmul.mubr.f32.gmra.mxu0 %v424
      %v492 = vpop.f32.mrf.mxu0
      %v493 = vadd.f32 0.0, %v492
      %v494 = vpop.f32.mrf.mxu0
      %v495 = vadd.f32 0.0, %v494
      %496 = vdwg.mxu0
      %v497 = vpack.c.bf16 %v493, %v493
      %v498 = vpack.c.bf16 %v495, %v495
      %v501 = vunpack.c.l.b16 %v497
      %v502 = vunpack.c.l.b16 %v498
      %v503 = vpack.c.b16 %v502, %v501
      %v504 = vrot.slane %v503, 6
      %505 = vrot.lane.b32.xlu0 %v504, 17
      %v506 = vpop.permute.xlu0 %505
      %v507 = vrot.slane %v506, 4
      %v508 = vsel %vm395, %v507, %v506
      %vm511 = vcmask 1043594
      %vm512 = vcmask 1047558
      %vm513 = vmor %vm512, %vm511
      %514 = vst.msk [vmem:[#allocation2] sm:$0xcc] %vm513, %v508
      %vm515 = vcmask 134146
      %516 = vst.msk [vmem:[#allocation2 + $0x8] sm:$0xc] %vm515, %v507
      %v517 = vld [vmem:[#allocation2] sm:$0xff]
      %v518 = vld [vmem:[%s3] sm:$0x11]
      %v520 = vunpack.c.l.b16 %v518
      %v521 = vunpack.c.h.b16 %v518
      %v522 = vpack.c.b16 %v520, %v520
      %v523 = vpack.c.b16 %v521, %v521
      %v525 = vpack.i.b16 %v522, %v522
      %v527 = vlaneseq
      %v528 = vshrl.u32 %v527, 7
      %v529 = vsub.s32 0, %v528
      %v530 = vrot.slane %v525, %v529
      %v532 = vpack.i.b16 %v523, %v523
      %v534 = vlaneseq
      %v535 = vshrl.u32 %v534, 7
      %v536 = vsub.s32 0, %v535
      %v537 = vrot.slane %v532, %v536
      %v540 = vunpack.c.l.b16 %v530
      %v541 = vunpack.c.l.b16 %v537
      %v542 = vpack.c.b16 %v541, %v540
      %v544 = vmul.bf16 %v517, %v542
      %545 = vst [vmem:[#allocation3] sm:$0xff] %v544
      %v546 = vld [vmem:[#allocation2] sm:$0xff]
      %v547 = vld [vmem:[#allocation2 + $0x8] sm:$0xf]
      %v548 = vld [vmem:[%s3] sm:$0x11]
      %v550 = vunpack.c.l.b16 %v548
      %v551 = vunpack.c.h.b16 %v548
      %v552 = vpack.c.b16 %v550, %v550
      %v553 = vpack.c.b16 %v551, %v551
      %v555 = vshrl.u32 %v552, 16
      %v556 = vpack.i.b16 %v555, %v555
      %v558 = vlaneseq
      %v559 = vshrl.u32 %v558, 7
      %v560 = vsub.s32 0, %v559
      %v561 = vrot.slane %v556, %v560
      %v563 = vshrl.u32 %v553, 16
      %v564 = vpack.i.b16 %v563, %v563
      %v566 = vlaneseq
      %v567 = vshrl.u32 %v566, 7
      %v568 = vsub.s32 0, %v567
      %v569 = vrot.slane %v564, %v568
      %v572 = vunpack.c.l.b16 %v561
      %v573 = vunpack.c.l.b16 %v569
      %v574 = vpack.c.b16 %v573, %v572
      %575 = vrot.lane.b32.xlu0 %v574, 1
      %v576 = vpop.permute.xlu0 %575
      %v577 = vrot.slane %v576, 4
      %vm578 = vcmask 7168
      %v579 = vsel %vm578, %v577, %v576
      %v582 = vmul.bf16 %v546, %v579
      %v583 = vmul.bf16 %v547, %v577
      %586 = vrot.lane.b32.xlu0 %v582, 127
      %v587 = vpop.permute.xlu0 %586
      %588 = vrot.lane.b32.xlu0 %v583, 127
      %v589 = vpop.permute.xlu0 %588
      %v590 = vrot.slane %v587, 4
      %v591 = vrot.slane %v589, 4
      %vm592 = vcmask 1043456
      %v593 = vsel %vm592, %v590, %v591
      %vm594 = vcmask 1039360
      %v595 = vsel %vm594, %v587, %v593
      %597 = vst [vmem:[#allocation3 + $0x8] sm:$0xff] %v595
      %v598 = vld [vmem:[#allocation2] sm:$0xff]
      %v599 = vld [vmem:[#allocation2 + $0x8] sm:$0xf]
      %v600 = vld [vmem:[%s3] sm:$0x22]
      %v602 = vunpack.c.l.b16 %v600
      %v603 = vunpack.c.h.b16 %v600
      %v604 = vpack.c.b16 %v602, %v602
      %v605 = vpack.c.b16 %v603, %v603
      %v607 = vpack.i.b16 %v604, %v604
      %v609 = vlaneseq
      %v610 = vshrl.u32 %v609, 7
      %v611 = vsub.s32 1, %v610
      %v612 = vrot.slane %v607, %v611
      %v614 = vpack.i.b16 %v605, %v605
      %v616 = vlaneseq
      %v617 = vshrl.u32 %v616, 7
      %v618 = vsub.s32 1, %v617
      %v619 = vrot.slane %v614, %v618
      %v622 = vunpack.c.l.b16 %v612
      %v623 = vunpack.c.l.b16 %v619
      %v624 = vpack.c.b16 %v623, %v622
      %625 = vrot.lane.b32.xlu0 %v624, 2
      %v626 = vpop.permute.xlu0 %625
      %v627 = vrot.slane %v626, 4
      %vm628 = vcmask 15360
      %v629 = vsel %vm628, %v627, %v626
      %v632 = vmul.bf16 %v598, %v629
      %v633 = vmul.bf16 %v599, %v627
      %636 = vrot.lane.b32.xlu0 %v632, 126
      %v637 = vpop.permute.xlu0 %636
      %638 = vrot.lane.b32.xlu0 %v633, 126
      %v639 = vpop.permute.xlu0 %638
      %v640 = vrot.slane %v637, 4
      %v641 = vrot.slane %v639, 4
      %v642 = vsel %vm592, %v640, %v641
      %vm643 = vcmask 1031168
      %v644 = vsel %vm643, %v637, %v642
      %646 = vst [vmem:[#allocation3 + $0x10] sm:$0xff] %v644
      %v647 = vld [vmem:[#allocation2] sm:$0xff]
      %v648 = vld [vmem:[#allocation2 + $0x8] sm:$0xf]
      %v649 = vld [vmem:[%s3] sm:$0x22]
      %v651 = vunpack.c.l.b16 %v649
      %v652 = vunpack.c.h.b16 %v649
      %v653 = vpack.c.b16 %v651, %v651
      %v654 = vpack.c.b16 %v652, %v652
      %v656 = vshrl.u32 %v653, 16
      %v657 = vpack.i.b16 %v656, %v656
      %v659 = vlaneseq
      %v660 = vshrl.u32 %v659, 7
      %v661 = vsub.s32 1, %v660
      %v662 = vrot.slane %v657, %v661
      %v664 = vshrl.u32 %v654, 16
      %v665 = vpack.i.b16 %v664, %v664
      %v667 = vlaneseq
      %v668 = vshrl.u32 %v667, 7
      %v669 = vsub.s32 1, %v668
      %v670 = vrot.slane %v665, %v669
      %v673 = vunpack.c.l.b16 %v662
      %v674 = vunpack.c.l.b16 %v670
      %v675 = vpack.c.b16 %v674, %v673
      %676 = vrot.lane.b32.xlu0 %v675, 16
      %v677 = vpop.permute.xlu0 %676
      %v678 = vrot.slane %v677, 4
      %vm679 = vcmask 130048
      %v680 = vsel %vm679, %v678, %v677
      %v683 = vmul.bf16 %v647, %v680
      %v684 = vmul.bf16 %v648, %v678
      %687 = vrot.lane.b32.xlu0 %v683, 112
      %v688 = vpop.permute.xlu0 %687
      %689 = vrot.lane.b32.xlu0 %v684, 112
      %v690 = vpop.permute.xlu0 %689
      %v691 = vrot.slane %v688, 4
      %v692 = vrot.slane %v690, 4
      %v693 = vsel %vm592, %v691, %v692
      %vm694 = vcmask 916480
      %v695 = vsel %vm694, %v688, %v693
      %697 = vst [vmem:[#allocation3 + $0x18] sm:$0xff] %v695
      %v698 = vld [vmem:[#allocation2] sm:$0xff]
      %v699 = vld [vmem:[#allocation2 + $0x8] sm:$0xf]
      %v700 = vld [vmem:[%s3] sm:$0x44]
      %v702 = vunpack.c.l.b16 %v700
      %v703 = vunpack.c.h.b16 %v700
      %v704 = vpack.c.b16 %v702, %v702
      %v705 = vpack.c.b16 %v703, %v703
      %v707 = vpack.i.b16 %v704, %v704
      %v709 = vlaneseq
      %v710 = vshrl.u32 %v709, 7
      %v711 = vsub.s32 2, %v710
      %v712 = vrot.slane %v707, %v711
      %v714 = vpack.i.b16 %v705, %v705
      %v716 = vlaneseq
      %v717 = vshrl.u32 %v716, 7
      %v718 = vsub.s32 2, %v717
      %v719 = vrot.slane %v714, %v718
      %v722 = vunpack.c.l.b16 %v712
      %v723 = vunpack.c.l.b16 %v719
      %v724 = vpack.c.b16 %v723, %v722
      %725 = vrot.lane.b32.xlu0 %v724, 17
      %v726 = vpop.permute.xlu0 %725
      %v727 = vrot.slane %v726, 4
      %v728 = vsel %vm395, %v727, %v726
      %v731 = vmul.bf16 %v698, %v728
      %v732 = vmul.bf16 %v699, %v727
      %735 = vrot.lane.b32.xlu0 %v731, 111
      %v736 = vpop.permute.xlu0 %735
      %737 = vrot.lane.b32.xlu0 %v732, 111
      %v738 = vpop.permute.xlu0 %737
      %v739 = vrot.slane %v736, 4
      %v740 = vrot.slane %v738, 4
      %v741 = vsel %vm592, %v739, %v740
      %vm742 = vcmask 908288
      %v743 = vsel %vm742, %v736, %v741
      %745 = vst [vmem:[#allocation3 + $0x20] sm:$0xff] %v743
      %v746 = vld [vmem:[#allocation2] sm:$0xff]
      %v747 = vld [vmem:[#allocation2 + $0x8] sm:$0xf]
      %v748 = vld [vmem:[%s3] sm:$0x44]
      %v750 = vunpack.c.l.b16 %v748
      %v751 = vunpack.c.h.b16 %v748
      %v752 = vpack.c.b16 %v750, %v750
      %v753 = vpack.c.b16 %v751, %v751
      %v755 = vshrl.u32 %v752, 16
      %v756 = vpack.i.b16 %v755, %v755
      %v758 = vlaneseq
      %v759 = vshrl.u32 %v758, 7
      %v760 = vsub.s32 2, %v759
      %v761 = vrot.slane %v756, %v760
      %v763 = vshrl.u32 %v753, 16
      %v764 = vpack.i.b16 %v763, %v763
      %v766 = vlaneseq
      %v767 = vshrl.u32 %v766, 7
      %v768 = vsub.s32 2, %v767
      %v769 = vrot.slane %v764, %v768
      %v772 = vunpack.c.l.b16 %v761
      %v773 = vunpack.c.l.b16 %v769
      %v774 = vpack.c.b16 %v773, %v772
      %775 = vrot.lane.b32.xlu0 %v774, 18
      %v776 = vpop.permute.xlu0 %775
      %v777 = vrot.slane %v776, 4
      %vm778 = vcmask 146432
      %v779 = vsel %vm778, %v777, %v776
      %v782 = vmul.bf16 %v746, %v779
      %v783 = vmul.bf16 %v747, %v777
      %786 = vrot.lane.b32.xlu0 %v782, 110
      %v787 = vpop.permute.xlu0 %786
      %788 = vrot.lane.b32.xlu0 %v783, 110
      %v789 = vpop.permute.xlu0 %788
      %v790 = vrot.slane %v787, 4
      %v791 = vrot.slane %v789, 4
      %v792 = vsel %vm592, %v790, %v791
      %vm793 = vcmask 900096
      %v794 = vsel %vm793, %v787, %v792
      %796 = vst [vmem:[#allocation3 + $0x28] sm:$0xff] %v794
      %v797 = vld [vmem:[#allocation2] sm:$0xff]
      %v798 = vld [vmem:[#allocation2 + $0x8] sm:$0xf]
      %v799 = vld [vmem:[%s3] sm:$0x88]
      %v801 = vunpack.c.l.b16 %v799
      %v802 = vunpack.c.h.b16 %v799
      %v803 = vpack.c.b16 %v801, %v801
      %v804 = vpack.c.b16 %v802, %v802
      %v806 = vpack.i.b16 %v803, %v803
      %v808 = vlaneseq
      %v809 = vshrl.u32 %v808, 7
      %v810 = vsub.s32 3, %v809
      %v811 = vrot.slane %v806, %v810
      %v813 = vpack.i.b16 %v804, %v804
      %v815 = vlaneseq
      %v816 = vshrl.u32 %v815, 7
      %v817 = vsub.s32 3, %v816
      %v818 = vrot.slane %v813, %v817
      %v821 = vunpack.c.l.b16 %v811
      %v822 = vunpack.c.l.b16 %v818
      %v823 = vpack.c.b16 %v822, %v821
      %824 = vrot.lane.b32.xlu0 %v823, 32
      %v825 = vpop.permute.xlu0 %824
      %v826 = vrot.slane %v825, 4
      %vm827 = vcmask 261120
      %v828 = vsel %vm827, %v826, %v825
      %v831 = vmul.bf16 %v797, %v828
      %v832 = vmul.bf16 %v798, %v826
      %835 = vrot.lane.b32.xlu0 %v831, 96
      %v836 = vpop.permute.xlu0 %835
      %837 = vrot.lane.b32.xlu0 %v832, 96
      %v838 = vpop.permute.xlu0 %837
      %v839 = vrot.slane %v836, 4
      %v840 = vrot.slane %v838, 4
      %v841 = vsel %vm592, %v839, %v840
      %vm842 = vcmask 785408
      %v843 = vsel %vm842, %v836, %v841
      %845 = vst [vmem:[#allocation3 + $0x30] sm:$0xff] %v843
      %v846 = vld [vmem:[#allocation2] sm:$0xff]
      %v847 = vld [vmem:[#allocation2 + $0x8] sm:$0xf]
      %v848 = vld [vmem:[%s3] sm:$0x88]
      %v850 = vunpack.c.l.b16 %v848
      %v851 = vunpack.c.h.b16 %v848
      %v852 = vpack.c.b16 %v850, %v850
      %v853 = vpack.c.b16 %v851, %v851
      %v855 = vshrl.u32 %v852, 16
      %v856 = vpack.i.b16 %v855, %v855
      %v858 = vlaneseq
      %v859 = vshrl.u32 %v858, 7
      %v860 = vsub.s32 3, %v859
      %v861 = vrot.slane %v856, %v860
      %v863 = vshrl.u32 %v853, 16
      %v864 = vpack.i.b16 %v863, %v863
      %v866 = vlaneseq
      %v867 = vshrl.u32 %v866, 7
      %v868 = vsub.s32 3, %v867
      %v869 = vrot.slane %v864, %v868
      %v872 = vunpack.c.l.b16 %v861
      %v873 = vunpack.c.l.b16 %v869
      %v874 = vpack.c.b16 %v873, %v872
      %875 = vrot.lane.b32.xlu0 %v874, 33
      %v876 = vpop.permute.xlu0 %875
      %v877 = vrot.slane %v876, 4
      %vm878 = vcmask 269312
      %v879 = vsel %vm878, %v877, %v876
      %v882 = vmul.bf16 %v846, %v879
      %v883 = vmul.bf16 %v847, %v877
      %886 = vrot.lane.b32.xlu0 %v882, 95
      %v887 = vpop.permute.xlu0 %886
      %888 = vrot.lane.b32.xlu0 %v883, 95
      %v889 = vpop.permute.xlu0 %888
      %v890 = vrot.slane %v887, 4
      %v891 = vrot.slane %v889, 4
      %v892 = vsel %vm592, %v890, %v891
      %vm893 = vcmask 777216
      %v894 = vsel %vm893, %v887, %v892
      %896 = vst [vmem:[#allocation3 + $0x38] sm:$0xff] %v894
      %v897 = vld [vmem:[#allocation2] sm:$0xff]
      %v898 = vld [vmem:[#allocation2 + $0x8] sm:$0xf]
      %v899 = vld [vmem:[%s3 + $0x8] sm:$0x11]
      %v901 = vunpack.c.l.b16 %v899
      %v902 = vunpack.c.h.b16 %v899
      %v903 = vpack.c.b16 %v901, %v901
      %v904 = vpack.c.b16 %v902, %v902
      %v906 = vpack.i.b16 %v903, %v903
      %v908 = vlaneseq
      %v909 = vshrl.u32 %v908, 7
      %v910 = vsub.s32 0, %v909
      %v911 = vrot.slane %v906, %v910
      %v913 = vpack.i.b16 %v904, %v904
      %v915 = vlaneseq
      %v916 = vshrl.u32 %v915, 7
      %v917 = vsub.s32 0, %v916
      %v918 = vrot.slane %v913, %v917
      %v921 = vunpack.c.l.b16 %v911
      %v922 = vunpack.c.l.b16 %v918
      %v923 = vpack.c.b16 %v922, %v921
      %924 = vrot.lane.b32.xlu0 %v923, 34
      %v925 = vpop.permute.xlu0 %924
      %v926 = vrot.slane %v925, 4
      %vm927 = vcmask 277504
      %v928 = vsel %vm927, %v926, %v925
      %v931 = vmul.bf16 %v897, %v928
      %v932 = vmul.bf16 %v898, %v926
      %935 = vrot.lane.b32.xlu0 %v931, 94
      %v936 = vpop.permute.xlu0 %935
      %937 = vrot.lane.b32.xlu0 %v932, 94
      %v938 = vpop.permute.xlu0 %937
      %v939 = vrot.slane %v936, 4
      %v940 = vrot.slane %v938, 4
      %v941 = vsel %vm592, %v939, %v940
      %vm942 = vcmask 769024
      %v943 = vsel %vm942, %v936, %v941
      %945 = vst [vmem:[#allocation3 + $0x40] sm:$0xff] %v943
      %v946 = vld [vmem:[%s4] sm:$0xf]
      %v947 = vld [vmem:[#allocation3] sm:$0xff]
      %v948 = vld [vmem:[#allocation3 + $0x8] sm:$0xff]
      %v949 = vld [vmem:[#allocation3 + $0x10] sm:$0xff]
      %v950 = vld [vmem:[#allocation3 + $0x18] sm:$0xff]
      %v951 = vld [vmem:[#allocation3 + $0x20] sm:$0xff]
      %v952 = vld [vmem:[#allocation3 + $0x28] sm:$0xff]
      %v953 = vld [vmem:[#allocation3 + $0x30] sm:$0xff]
      %v954 = vld [vmem:[#allocation3 + $0x38] sm:$0xff]
      %v955 = vld [vmem:[#allocation3 + $0x40] sm:$0xff]
      %v965 = vunpack.c.l.b16 %v947
      %v966 = vunpack.c.h.b16 %v947
      %v967 = vunpack.c.l.b16 %v948
      %v968 = vunpack.c.h.b16 %v948
      %v969 = vunpack.c.l.b16 %v949
      %v970 = vunpack.c.h.b16 %v949
      %v971 = vunpack.c.l.b16 %v950
      %v972 = vunpack.c.h.b16 %v950
      %v973 = vunpack.c.l.b16 %v951
      %v974 = vunpack.c.h.b16 %v951
      %v975 = vunpack.c.l.b16 %v952
      %v976 = vunpack.c.h.b16 %v952
      %v977 = vunpack.c.l.b16 %v953
      %v978 = vunpack.c.h.b16 %v953
      %v979 = vunpack.c.l.b16 %v954
      %v980 = vunpack.c.h.b16 %v954
      %v981 = vunpack.c.l.b16 %v955
      %v982 = vunpack.c.h.b16 %v955
      %v983 = vpack.c.b16 %v967, %v965
      %v984 = vpack.c.b16 %v968, %v966
      %v985 = vpack.c.b16 %v971, %v969
      %v986 = vpack.c.b16 %v972, %v970
      %v987 = vpack.c.b16 %v975, %v973
      %v988 = vpack.c.b16 %v976, %v974
      %v989 = vpack.c.b16 %v979, %v977
      %v990 = vpack.c.b16 %v980, %v978
      %v991 = vpack.c.b16 %v981, %v981
      %v992 = vpack.c.b16 %v982, %v982
      %vm1001 = vcmask 588800
      %v1003 = vsel %vm1001, %v946, 0
      %vm1005 = vcmask 1043456
      %v1007 = vsel %vm1005, %v991, 0
      %v1010 = vsel %vm1005, %v992, 0
      %1012 = vmatprep.subr.bf16.mxu0 0
      %1013 = vmatpush1.bf16.msra.mxu0 0
      %1014 = vmatprep.subr.bf16.mxu0 0
      %1015 = vmatpush1.bf16.msra.mxu0 0
      %1016 = vmatprep.subr.bf16.mxu0 0
      %1017 = vmatpush1.bf16.msra.mxu0 0
      %1018 = vmatprep.subr.bf16.mxu0 %v1010
      %1019 = vmatpush1.bf16.msra.mxu0 %v1007
      %1020 = vmatprep.subr.bf16.mxu0 %v990
      %1021 = vmatpush1.bf16.msra.mxu0 %v989
      %1022 = vmatprep.subr.bf16.mxu0 %v988
      %1023 = vmatpush1.bf16.msra.mxu0 %v987
      %1024 = vmatprep.subr.bf16.mxu0 %v986
      %1025 = vmatpush1.bf16.msra.mxu0 %v985
      %1026 = vmatprep.subr.bf16.mxu0 %v984
      %1027 = vmatpush1.bf16.msra.mxu0 %v983
      %1028 = vmatprep.subr.bf16.mxu0 0
      %1029 = vmatpush2.bf16.msra.mxu0 0
      %1030 = vmatprep.subr.bf16.mxu0 0
      %1031 = vmatpush2.bf16.msra.mxu0 0
      %1032 = vmatprep.subr.bf16.mxu0 0
      %1033 = vmatpush2.bf16.msra.mxu0 0
      %1034 = vmatprep.subr.bf16.mxu0 0
      %1035 = vmatpush2.bf16.msra.mxu0 0
      %1036 = vmatprep.subr.bf16.mxu0 0
      %1037 = vmatpush2.bf16.msra.mxu0 0
      %1038 = vmatprep.subr.bf16.mxu0 0
      %1039 = vmatpush2.bf16.msra.mxu0 0
      %1040 = vmatprep.subr.bf16.mxu0 0
      %1041 = vmatpush2.bf16.msra.mxu0 0
      %1042 = vmatprep.subr.bf16.mxu0 0
      %1043 = vmatpush2.bf16.msra.mxu0 0
      %1044 = vmatprep.mubr.bf16.mxu0 0
      %1045 = vmatmul.mubr.bf16.gmra.mxu0 %v1003
      %v1046 = vpop.f32.mrf.mxu0
      %v1047 = vadd.f32 0.0, %v1046
      %v1048 = vpop.f32.mrf.mxu0
      %v1049 = vadd.f32 0.0, %v1048
      %v1050 = vpop.f32.mrf.mxu0
      %v1051 = vpop.f32.mrf.mxu0
      %1052 = vdwg.mxu0
      %v1053 = vld [vmem:[%s5] sm:$0xff]
      %1055 = vset.pattern.permute.xlu0 0
      %1056 = vperm.xlu0 %1055, %v1053
      %v1057 = vpop.permute.xlu0 %1056
      %v1059 = vmul.f32 %v1047, %v1057
      %v1060 = vmul.f32 %v1049, %v1057
      %v1061 = vld [vmem:[%s6] sm:$0xff]
      %1063 = vset.pattern.permute.xlu0 0
      %1064 = vperm.xlu0 %1063, %v1061
      %v1065 = vpop.permute.xlu0 %1064
      %v1067 = vadd.f32 %v1059, %v1065
      %v1068 = vadd.f32 %v1060, %v1065
      %v1069 = vmax.f32 %v1067, 0.0
      %v1070 = vmax.f32 %v1068, 0.0
      %v1071 = vpack.c.bf16 %v1069, %v1069
      %v1072 = vpack.c.bf16 %v1070, %v1070
      %v1075 = vunpack.c.l.b16 %v1071
      %v1076 = vunpack.c.l.b16 %v1072
      %v1077 = vpack.c.b16 %v1076, %v1075
      %1078 = vrot.lane.b32.xlu0 %v1077, 17
      %v1079 = vpop.permute.xlu0 %1078
      %v1080 = vrot.slane %v1079, 4
      %v1081 = vsel %vm395, %v1080, %v1079
      %vm1084 = vcmask 1043592
      %vm1085 = vcmask 1047556
      %vm1086 = vmor %vm1085, %vm1084
      %1087 = vst.msk [vmem:[#allocation2] sm:$0xff] %vm1086, %v1081
      %vm1088 = vcmask 134144
      %1089 = vst.msk [vmem:[#allocation2 + $0x8] sm:$0xf] %vm1088, %v1080
      %v1090 = vld [vmem:[#allocation2] sm:$0xff]
      %v1091 = vld [vmem:[%s3] sm:$0x11]
      %v1093 = vunpack.c.l.b16 %v1091
      %v1094 = vunpack.c.h.b16 %v1091
      %v1095 = vpack.c.b16 %v1093, %v1093
      %v1096 = vpack.c.b16 %v1094, %v1094
      %v1098 = vpack.i.b16 %v1095, %v1095
      %v1100 = vlaneseq
      %v1101 = vshrl.u32 %v1100, 7
      %v1102 = vsub.s32 0, %v1101
      %v1103 = vrot.slane %v1098, %v1102
      %v1105 = vpack.i.b16 %v1096, %v1096
      %v1107 = vlaneseq
      %v1108 = vshrl.u32 %v1107, 7
      %v1109 = vsub.s32 0, %v1108
      %v1110 = vrot.slane %v1105, %v1109
      %v1113 = vunpack.c.l.b16 %v1103
      %v1114 = vunpack.c.l.b16 %v1110
      %v1115 = vpack.c.b16 %v1114, %v1113
      %v1117 = vmul.bf16 %v1090, %v1115
      %1118 = vst [vmem:[#allocation3] sm:$0xff] %v1117
      %v1119 = vld [vmem:[#allocation2] sm:$0xff]
      %v1120 = vld [vmem:[#allocation2 + $0x8] sm:$0xf]
      %v1121 = vld [vmem:[%s3] sm:$0x11]
      %v1123 = vunpack.c.l.b16 %v1121
      %v1124 = vunpack.c.h.b16 %v1121
      %v1125 = vpack.c.b16 %v1123, %v1123
      %v1126 = vpack.c.b16 %v1124, %v1124
      %v1128 = vshrl.u32 %v1125, 16
      %v1129 = vpack.i.b16 %v1128, %v1128
      %v1131 = vlaneseq
      %v1132 = vshrl.u32 %v1131, 7
      %v1133 = vsub.s32 0, %v1132
      %v1134 = vrot.slane %v1129, %v1133
      %v1136 = vshrl.u32 %v1126, 16
      %v1137 = vpack.i.b16 %v1136, %v1136
      %v1139 = vlaneseq
      %v1140 = vshrl.u32 %v1139, 7
      %v1141 = vsub.s32 0, %v1140
      %v1142 = vrot.slane %v1137, %v1141
      %v1145 = vunpack.c.l.b16 %v1134
      %v1146 = vunpack.c.l.b16 %v1142
      %v1147 = vpack.c.b16 %v1146, %v1145
      %1148 = vrot.lane.b32.xlu0 %v1147, 1
      %v1149 = vpop.permute.xlu0 %1148
      %v1150 = vrot.slane %v1149, 4
      %v1151 = vsel %vm578, %v1150, %v1149
      %v1154 = vmul.bf16 %v1119, %v1151
      %v1155 = vmul.bf16 %v1120, %v1150
      %1158 = vrot.lane.b32.xlu0 %v1154, 127
      %v1159 = vpop.permute.xlu0 %1158
      %1160 = vrot.lane.b32.xlu0 %v1155, 127
      %v1161 = vpop.permute.xlu0 %1160
      %v1162 = vrot.slane %v1159, 4
      %v1163 = vrot.slane %v1161, 4
      %v1164 = vsel %vm592, %v1162, %v1163
      %v1165 = vsel %vm594, %v1159, %v1164
      %1167 = vst [vmem:[#allocation3 + $0x8] sm:$0xff] %v1165
      %v1168 = vld [vmem:[#allocation2] sm:$0xff]
      %v1169 = vld [vmem:[#allocation2 + $0x8] sm:$0xf]
      %v1170 = vld [vmem:[%s3] sm:$0x22]
      %v1172 = vunpack.c.l.b16 %v1170
      %v1173 = vunpack.c.h.b16 %v1170
      %v1174 = vpack.c.b16 %v1172, %v1172
      %v1175 = vpack.c.b16 %v1173, %v1173
      %v1177 = vpack.i.b16 %v1174, %v1174
      %v1179 = vlaneseq
      %v1180 = vshrl.u32 %v1179, 7
      %v1181 = vsub.s32 1, %v1180
      %v1182 = vrot.slane %v1177, %v1181
      %v1184 = vpack.i.b16 %v1175, %v1175
      %v1186 = vlaneseq
      %v1187 = vshrl.u32 %v1186, 7
      %v1188 = vsub.s32 1, %v1187
      %v1189 = vrot.slane %v1184, %v1188
      %v1192 = vunpack.c.l.b16 %v1182
      %v1193 = vunpack.c.l.b16 %v1189
      %v1194 = vpack.c.b16 %v1193, %v1192
      %1195 = vrot.lane.b32.xlu0 %v1194, 2
      %v1196 = vpop.permute.xlu0 %1195
      %v1197 = vrot.slane %v1196, 4
      %v1198 = vsel %vm628, %v1197, %v1196
      %v1201 = vmul.bf16 %v1168, %v1198
      %v1202 = vmul.bf16 %v1169, %v1197
      %1205 = vrot.lane.b32.xlu0 %v1201, 126
      %v1206 = vpop.permute.xlu0 %1205
      %1207 = vrot.lane.b32.xlu0 %v1202, 126
      %v1208 = vpop.permute.xlu0 %1207
      %v1209 = vrot.slane %v1206, 4
      %v1210 = vrot.slane %v1208, 4
      %v1211 = vsel %vm592, %v1209, %v1210
      %v1212 = vsel %vm643, %v1206, %v1211
      %1214 = vst [vmem:[#allocation3 + $0x10] sm:$0xff] %v1212
      %v1215 = vld [vmem:[#allocation2] sm:$0xff]
      %v1216 = vld [vmem:[#allocation2 + $0x8] sm:$0xf]
      %v1217 = vld [vmem:[%s3] sm:$0x22]
      %v1219 = vunpack.c.l.b16 %v1217
      %v1220 = vunpack.c.h.b16 %v1217
      %v1221 = vpack.c.b16 %v1219, %v1219
      %v1222 = vpack.c.b16 %v1220, %v1220
      %v1224 = vshrl.u32 %v1221, 16
      %v1225 = vpack.i.b16 %v1224, %v1224
      %v1227 = vlaneseq
      %v1228 = vshrl.u32 %v1227, 7
      %v1229 = vsub.s32 1, %v1228
      %v1230 = vrot.slane %v1225, %v1229
      %v1232 = vshrl.u32 %v1222, 16
      %v1233 = vpack.i.b16 %v1232, %v1232
      %v1235 = vlaneseq
      %v1236 = vshrl.u32 %v1235, 7
      %v1237 = vsub.s32 1, %v1236
      %v1238 = vrot.slane %v1233, %v1237
      %v1241 = vunpack.c.l.b16 %v1230
      %v1242 = vunpack.c.l.b16 %v1238
      %v1243 = vpack.c.b16 %v1242, %v1241
      %1244 = vrot.lane.b32.xlu0 %v1243, 16
      %v1245 = vpop.permute.xlu0 %1244
      %v1246 = vrot.slane %v1245, 4
      %v1247 = vsel %vm679, %v1246, %v1245
      %v1250 = vmul.bf16 %v1215, %v1247
      %v1251 = vmul.bf16 %v1216, %v1246
      %1254 = vrot.lane.b32.xlu0 %v1250, 112
      %v1255 = vpop.permute.xlu0 %1254
      %1256 = vrot.lane.b32.xlu0 %v1251, 112
      %v1257 = vpop.permute.xlu0 %1256
      %v1258 = vrot.slane %v1255, 4
      %v1259 = vrot.slane %v1257, 4
      %v1260 = vsel %vm592, %v1258, %v1259
      %v1261 = vsel %vm694, %v1255, %v1260
      %1263 = vst [vmem:[#allocation3 + $0x18] sm:$0xff] %v1261
      %v1264 = vld [vmem:[#allocation2] sm:$0xff]
      %v1265 = vld [vmem:[#allocation2 + $0x8] sm:$0xf]
      %v1266 = vld [vmem:[%s3] sm:$0x44]
      %v1268 = vunpack.c.l.b16 %v1266
      %v1269 = vunpack.c.h.b16 %v1266
      %v1270 = vpack.c.b16 %v1268, %v1268
      %v1271 = vpack.c.b16 %v1269, %v1269
      %v1273 = vpack.i.b16 %v1270, %v1270
      %v1275 = vlaneseq
      %v1276 = vshrl.u32 %v1275, 7
      %v1277 = vsub.s32 2, %v1276
      %v1278 = vrot.slane %v1273, %v1277
      %v1280 = vpack.i.b16 %v1271, %v1271
      %v1282 = vlaneseq
      %v1283 = vshrl.u32 %v1282, 7
      %v1284 = vsub.s32 2, %v1283
      %v1285 = vrot.slane %v1280, %v1284
      %v1288 = vunpack.c.l.b16 %v1278
      %v1289 = vunpack.c.l.b16 %v1285
      %v1290 = vpack.c.b16 %v1289, %v1288
      %1291 = vrot.lane.b32.xlu0 %v1290, 17
      %v1292 = vpop.permute.xlu0 %1291
      %v1293 = vrot.slane %v1292, 4
      %v1294 = vsel %vm395, %v1293, %v1292
      %v1297 = vmul.bf16 %v1264, %v1294
      %v1298 = vmul.bf16 %v1265, %v1293
      %1301 = vrot.lane.b32.xlu0 %v1297, 111
      %v1302 = vpop.permute.xlu0 %1301
      %1303 = vrot.lane.b32.xlu0 %v1298, 111
      %v1304 = vpop.permute.xlu0 %1303
      %v1305 = vrot.slane %v1302, 4
      %v1306 = vrot.slane %v1304, 4
      %v1307 = vsel %vm592, %v1305, %v1306
      %v1308 = vsel %vm742, %v1302, %v1307
      %1310 = vst [vmem:[#allocation3 + $0x20] sm:$0xff] %v1308
      %v1311 = vld [vmem:[#allocation2] sm:$0xff]
      %v1312 = vld [vmem:[#allocation2 + $0x8] sm:$0xf]
      %v1313 = vld [vmem:[%s3] sm:$0x44]
      %v1315 = vunpack.c.l.b16 %v1313
      %v1316 = vunpack.c.h.b16 %v1313
      %v1317 = vpack.c.b16 %v1315, %v1315
      %v1318 = vpack.c.b16 %v1316, %v1316
      %v1320 = vshrl.u32 %v1317, 16
      %v1321 = vpack.i.b16 %v1320, %v1320
      %v1323 = vlaneseq
      %v1324 = vshrl.u32 %v1323, 7
      %v1325 = vsub.s32 2, %v1324
      %v1326 = vrot.slane %v1321, %v1325
      %v1328 = vshrl.u32 %v1318, 16
      %v1329 = vpack.i.b16 %v1328, %v1328
      %v1331 = vlaneseq
      %v1332 = vshrl.u32 %v1331, 7
      %v1333 = vsub.s32 2, %v1332
      %v1334 = vrot.slane %v1329, %v1333
      %v1337 = vunpack.c.l.b16 %v1326
      %v1338 = vunpack.c.l.b16 %v1334
      %v1339 = vpack.c.b16 %v1338, %v1337
      %1340 = vrot.lane.b32.xlu0 %v1339, 18
      %v1341 = vpop.permute.xlu0 %1340
      %v1342 = vrot.slane %v1341, 4
      %v1343 = vsel %vm778, %v1342, %v1341
      %v1346 = vmul.bf16 %v1311, %v1343
      %v1347 = vmul.bf16 %v1312, %v1342
      %1350 = vrot.lane.b32.xlu0 %v1346, 110
      %v1351 = vpop.permute.xlu0 %1350
      %1352 = vrot.lane.b32.xlu0 %v1347, 110
      %v1353 = vpop.permute.xlu0 %1352
      %v1354 = vrot.slane %v1351, 4
      %v1355 = vrot.slane %v1353, 4
      %v1356 = vsel %vm592, %v1354, %v1355
      %v1357 = vsel %vm793, %v1351, %v1356
      %1359 = vst [vmem:[#allocation3 + $0x28] sm:$0xff] %v1357
      %v1360 = vld [vmem:[#allocation2] sm:$0xff]
      %v1361 = vld [vmem:[#allocation2 + $0x8] sm:$0xf]
      %v1362 = vld [vmem:[%s3] sm:$0x88]
      %v1364 = vunpack.c.l.b16 %v1362
      %v1365 = vunpack.c.h.b16 %v1362
      %v1366 = vpack.c.b16 %v1364, %v1364
      %v1367 = vpack.c.b16 %v1365, %v1365
      %v1369 = vpack.i.b16 %v1366, %v1366
      %v1371 = vlaneseq
      %v1372 = vshrl.u32 %v1371, 7
      %v1373 = vsub.s32 3, %v1372
      %v1374 = vrot.slane %v1369, %v1373
      %v1376 = vpack.i.b16 %v1367, %v1367
      %v1378 = vlaneseq
      %v1379 = vshrl.u32 %v1378, 7
      %v1380 = vsub.s32 3, %v1379
      %v1381 = vrot.slane %v1376, %v1380
      %v1384 = vunpack.c.l.b16 %v1374
      %v1385 = vunpack.c.l.b16 %v1381
      %v1386 = vpack.c.b16 %v1385, %v1384
      %1387 = vrot.lane.b32.xlu0 %v1386, 32
      %v1388 = vpop.permute.xlu0 %1387
      %v1389 = vrot.slane %v1388, 4
      %v1390 = vsel %vm827, %v1389, %v1388
      %v1393 = vmul.bf16 %v1360, %v1390
      %v1394 = vmul.bf16 %v1361, %v1389
      %1397 = vrot.lane.b32.xlu0 %v1393, 96
      %v1398 = vpop.permute.xlu0 %1397
      %1399 = vrot.lane.b32.xlu0 %v1394, 96
      %v1400 = vpop.permute.xlu0 %1399
      %v1401 = vrot.slane %v1398, 4
      %v1402 = vrot.slane %v1400, 4
      %v1403 = vsel %vm592, %v1401, %v1402
      %v1404 = vsel %vm842, %v1398, %v1403
      %1406 = vst [vmem:[#allocation3 + $0x30] sm:$0xff] %v1404
      %v1407 = vld [vmem:[#allocation2] sm:$0xff]
      %v1408 = vld [vmem:[#allocation2 + $0x8] sm:$0xf]
      %v1409 = vld [vmem:[%s3] sm:$0x88]
      %v1411 = vunpack.c.l.b16 %v1409
      %v1412 = vunpack.c.h.b16 %v1409
      %v1413 = vpack.c.b16 %v1411, %v1411
      %v1414 = vpack.c.b16 %v1412, %v1412
      %v1416 = vshrl.u32 %v1413, 16
      %v1417 = vpack.i.b16 %v1416, %v1416
      %v1419 = vlaneseq
      %v1420 = vshrl.u32 %v1419, 7
      %v1421 = vsub.s32 3, %v1420
      %v1422 = vrot.slane %v1417, %v1421
      %v1424 = vshrl.u32 %v1414, 16
      %v1425 = vpack.i.b16 %v1424, %v1424
      %v1427 = vlaneseq
      %v1428 = vshrl.u32 %v1427, 7
      %v1429 = vsub.s32 3, %v1428
      %v1430 = vrot.slane %v1425, %v1429
      %v1433 = vunpack.c.l.b16 %v1422
      %v1434 = vunpack.c.l.b16 %v1430
      %v1435 = vpack.c.b16 %v1434, %v1433
      %1436 = vrot.lane.b32.xlu0 %v1435, 33
      %v1437 = vpop.permute.xlu0 %1436
      %v1438 = vrot.slane %v1437, 4
      %v1439 = vsel %vm878, %v1438, %v1437
      %v1442 = vmul.bf16 %v1407, %v1439
      %v1443 = vmul.bf16 %v1408, %v1438
      %1446 = vrot.lane.b32.xlu0 %v1442, 95
      %v1447 = vpop.permute.xlu0 %1446
      %1448 = vrot.lane.b32.xlu0 %v1443, 95
      %v1449 = vpop.permute.xlu0 %1448
      %v1450 = vrot.slane %v1447, 4
      %v1451 = vrot.slane %v1449, 4
      %v1452 = vsel %vm592, %v1450, %v1451
      %v1453 = vsel %vm893, %v1447, %v1452
      %1455 = vst [vmem:[#allocation3 + $0x38] sm:$0xff] %v1453
      %v1456 = vld [vmem:[#allocation2] sm:$0xff]
      %v1457 = vld [vmem:[#allocation2 + $0x8] sm:$0xf]
      %v1458 = vld [vmem:[%s3 + $0x8] sm:$0x11]
      %v1460 = vunpack.c.l.b16 %v1458
      %v1461 = vunpack.c.h.b16 %v1458
      %v1462 = vpack.c.b16 %v1460, %v1460
      %v1463 = vpack.c.b16 %v1461, %v1461
      %v1465 = vpack.i.b16 %v1462, %v1462
      %v1467 = vlaneseq
      %v1468 = vshrl.u32 %v1467, 7
      %v1469 = vsub.s32 0, %v1468
      %v1470 = vrot.slane %v1465, %v1469
      %v1472 = vpack.i.b16 %v1463, %v1463
      %v1474 = vlaneseq
      %v1475 = vshrl.u32 %v1474, 7
      %v1476 = vsub.s32 0, %v1475
      %v1477 = vrot.slane %v1472, %v1476
      %v1480 = vunpack.c.l.b16 %v1470
      %v1481 = vunpack.c.l.b16 %v1477
      %v1482 = vpack.c.b16 %v1481, %v1480
      %1483 = vrot.lane.b32.xlu0 %v1482, 34
      %v1484 = vpop.permute.xlu0 %1483
      %v1485 = vrot.slane %v1484, 4
      %v1486 = vsel %vm927, %v1485, %v1484
      %v1489 = vmul.bf16 %v1456, %v1486
      %v1490 = vmul.bf16 %v1457, %v1485
      %1493 = vrot.lane.b32.xlu0 %v1489, 94
      %v1494 = vpop.permute.xlu0 %1493
      %1495 = vrot.lane.b32.xlu0 %v1490, 94
      %v1496 = vpop.permute.xlu0 %1495
      %v1497 = vrot.slane %v1494, 4
      %v1498 = vrot.slane %v1496, 4
      %v1499 = vsel %vm592, %v1497, %v1498
      %v1500 = vsel %vm942, %v1494, %v1499
      %1502 = vst [vmem:[#allocation3 + $0x40] sm:$0xff] %v1500
      %v1503 = vld [vmem:[%s7] sm:$0xf]
      %v1504 = vld [vmem:[#allocation3] sm:$0xff]
      %v1505 = vld [vmem:[#allocation3 + $0x8] sm:$0xff]
      %v1506 = vld [vmem:[#allocation3 + $0x10] sm:$0xff]
      %v1507 = vld [vmem:[#allocation3 + $0x18] sm:$0xff]
      %v1508 = vld [vmem:[#allocation3 + $0x20] sm:$0xff]
      %v1509 = vld [vmem:[#allocation3 + $0x28] sm:$0xff]
      %v1510 = vld [vmem:[#allocation3 + $0x30] sm:$0xff]
      %v1511 = vld [vmem:[#allocation3 + $0x38] sm:$0xff]
      %v1512 = vld [vmem:[#allocation3 + $0x40] sm:$0xff]
      %v1522 = vunpack.c.l.b16 %v1504
      %v1523 = vunpack.c.h.b16 %v1504
      %v1524 = vunpack.c.l.b16 %v1505
      %v1525 = vunpack.c.h.b16 %v1505
      %v1526 = vunpack.c.l.b16 %v1506
      %v1527 = vunpack.c.h.b16 %v1506
      %v1528 = vunpack.c.l.b16 %v1507
      %v1529 = vunpack.c.h.b16 %v1507
      %v1530 = vunpack.c.l.b16 %v1508
      %v1531 = vunpack.c.h.b16 %v1508
      %v1532 = vunpack.c.l.b16 %v1509
      %v1533 = vunpack.c.h.b16 %v1509
      %v1534 = vunpack.c.l.b16 %v1510
      %v1535 = vunpack.c.h.b16 %v1510
      %v1536 = vunpack.c.l.b16 %v1511
      %v1537 = vunpack.c.h.b16 %v1511
      %v1538 = vunpack.c.l.b16 %v1512
      %v1539 = vunpack.c.h.b16 %v1512
      %v1540 = vpack.c.b16 %v1524, %v1522
      %v1541 = vpack.c.b16 %v1525, %v1523
      %v1542 = vpack.c.b16 %v1528, %v1526
      %v1543 = vpack.c.b16 %v1529, %v1527
      %v1544 = vpack.c.b16 %v1532, %v1530
      %v1545 = vpack.c.b16 %v1533, %v1531
      %v1546 = vpack.c.b16 %v1536, %v1534
      %v1547 = vpack.c.b16 %v1537, %v1535
      %v1548 = vpack.c.b16 %v1538, %v1538
      %v1549 = vpack.c.b16 %v1539, %v1539
      %v1559 = vsel %vm1001, %v1503, 0
      %v1562 = vsel %vm1005, %v1548, 0
      %v1565 = vsel %vm1005, %v1549, 0
      %1567 = vmatprep.subr.bf16.mxu0 0
      %1568 = vmatpush1.bf16.msra.mxu0 0
      %1569 = vmatprep.subr.bf16.mxu0 0
      %1570 = vmatpush1.bf16.msra.mxu0 0
      %1571 = vmatprep.subr.bf16.mxu0 0
      %1572 = vmatpush1.bf16.msra.mxu0 0
      %1573 = vmatprep.subr.bf16.mxu0 %v1565
      %1574 = vmatpush1.bf16.msra.mxu0 %v1562
      %1575 = vmatprep.subr.bf16.mxu0 %v1547
      %1576 = vmatpush1.bf16.msra.mxu0 %v1546
      %1577 = vmatprep.subr.bf16.mxu0 %v1545
      %1578 = vmatpush1.bf16.msra.mxu0 %v1544
      %1579 = vmatprep.subr.bf16.mxu0 %v1543
      %1580 = vmatpush1.bf16.msra.mxu0 %v1542
      %1581 = vmatprep.subr.bf16.mxu0 %v1541
      %1582 = vmatpush1.bf16.msra.mxu0 %v1540
      %1583 = vmatprep.subr.bf16.mxu0 0
      %1584 = vmatpush2.bf16.msra.mxu0 0
      %1585 = vmatprep.subr.bf16.mxu0 0
      %1586 = vmatpush2.bf16.msra.mxu0 0
      %1587 = vmatprep.subr.bf16.mxu0 0
      %1588 = vmatpush2.bf16.msra.mxu0 0
      %1589 = vmatprep.subr.bf16.mxu0 0
      %1590 = vmatpush2.bf16.msra.mxu0 0
      %1591 = vmatprep.subr.bf16.mxu0 0
      %1592 = vmatpush2.bf16.msra.mxu0 0
      %1593 = vmatprep.subr.bf16.mxu0 0
      %1594 = vmatpush2.bf16.msra.mxu0 0
      %1595 = vmatprep.subr.bf16.mxu0 0
      %1596 = vmatpush2.bf16.msra.mxu0 0
      %1597 = vmatprep.subr.bf16.mxu0 0
      %1598 = vmatpush2.bf16.msra.mxu0 0
      %1599 = vmatprep.mubr.bf16.mxu0 0
      %1600 = vmatmul.mubr.bf16.gmra.mxu0 %v1559
      %v1601 = vpop.f32.mrf.mxu0
      %v1602 = vadd.f32 0.0, %v1601
      %v1603 = vpop.f32.mrf.mxu0
      %v1604 = vadd.f32 0.0, %v1603
      %v1605 = vpop.f32.mrf.mxu0
      %v1606 = vpop.f32.mrf.mxu0
      %1607 = vdwg.mxu0
      %v1608 = vld [vmem:[%s8] sm:$0xff]
      %1610 = vset.pattern.permute.xlu0 0
      %1611 = vperm.xlu0 %1610, %v1608
      %v1612 = vpop.permute.xlu0 %1611
      %v1614 = vmul.f32 %v1602, %v1612
      %v1615 = vmul.f32 %v1604, %v1612
      %v1616 = vld [vmem:[%s9] sm:$0xff]
      %1618 = vset.pattern.permute.xlu0 0
      %1619 = vperm.xlu0 %1618, %v1616
      %v1620 = vpop.permute.xlu0 %1619
      %v1622 = vadd.f32 %v1614, %v1620
      %v1623 = vadd.f32 %v1615, %v1620
      %v1624 = vmax.f32 %v1622, 0.0
      %v1625 = vmax.f32 %v1623, 0.0
      %1626 = vst [vmem:[%s376] sm:$0xff] %v1624
      %1627 = vst [vmem:[%s376 + $0x8] sm:$0xff] %v1625
      %p1628 = scmp.lt.s32.totalorder %s21, 1
      %s1629 = scalar_select %p1628, %s21, 1
      %s1630 = smul.addr %s1629, 2
      %s1631 = smul.addr %s1630, 8
      %s1632 = scalar_lea.vmem %s10, %s1631
      // Predicated region
      $region61: #{up_forward.1} parent=59 // pred_check
        %p1633 = pneg %p259
      $region62: #{up_forward.1} parent=59 // pred_check_branch
        %1635 = sbr.rel (%p1633) target = $region64
      $region63: #{up_forward.1} parent=59 // pred_region
        _
      $region64: #{up_forward.1} parent=59 // pred_fallthru
        _
    $region60: #{up_forward.1} parent=5 // pred_fallthru
      _
    %p1636 = scmp.le.s32.totalorder 2, %s16
    // Predicated region
    $region65: #{up_forward.1} parent=5 // pred_check
      %p1637 = pneg %p1636
    $region66: #{up_forward.1} parent=5 // pred_check_branch
      %1639 = sbr.rel (%p1637) target = $region68
    $region67: #{up_forward.1} parent=5 // pred_region
      %s1640 = ssub.s32 %s16, 2
      // Predicated region
      $region69: #{up_forward.1} parent=67 // pred_check
        %p1641 = pneg %p265
      $region70: #{up_forward.1} parent=67 // pred_check_branch
        %1643 = sbr.rel (%p1641) target = $region72
      $region71: #{up_forward.1} parent=67 // pred_region
        %p1644 = scmp.lt.s32.totalorder %s22, 1
        %s1645 = scalar_select %p1644, %s22, 1
        %s1646 = smul.addr %s1645, 2
        %s1647 = smul.addr %s1646, 8
        %s1648 = scalar_lea.vmem %s10, %s1647
      $region72: #{up_forward.1} parent=67 // pred_fallthru
        _
    $region68: #{up_forward.1} parent=5 // pred_fallthru
      _
  $region6: #{up_forward.1} parent=0 // loop_footer
    %s20 = sadd.s32 1, %s16
  $region7: #{up_forward.1} parent=0 // loop_footer_branch
    %15 = sbr.rel target = $region3
  $region8: #{up_forward.1} parent=0 // loop_exit
    _

</llo_original>
